<compile_context>
chip_gen: v6e
topology: v6e:2x2x1
jax: 0.10.0
libtpu: 0.0.40
codegen_flags: <defaults>
</compile_context>

<pallas_src>
import functools
import math

import jax
import jax.numpy as jnp
from jax import lax
from jax.experimental import pallas as pl
from jax.experimental.pallas import tpu as pltpu

block_size = 8       # T
n_embd = 32          # C
num_heads = 4        # H
head_size = n_embd // num_heads   # 8


def mha_kernel(x_ref, wqkv_ref, wp_ref, bp_ref, o_ref, *, heads, hs):
    """One grid step: causal MHA + output projection for a (bt, T, C) batch tile."""
    bt, T, C = x_ref.shape
    H = heads
    scale = C ** (-0.5)          # matches `* C ** (-0.5)` in the PyTorch Head

    # Fused QKV projection over the whole batch tile: (bt*T, C) @ (C, 3*H*hs).
    x2d = x_ref[...].reshape(bt * T, C)
    qkv = jnp.dot(x2d, wqkv_ref[...], preferred_element_type=jnp.float32)

    # Causal mask (tril == 1), built once.  Large finite negative instead of -inf gives
    # an identical softmax here (diagonal never masked) and is NaN-proof.
    row = lax.broadcasted_iota(jnp.int32, (T, T), 0)
    col = lax.broadcasted_iota(jnp.int32, (T, T), 1)
    causal = col <= row
    neg_big = jnp.float32(-1e30)

    ctx_rows = []
    for b in range(bt):                    # static, unrolled (bt*H = 8 tiny iterations)
        r0 = b * T
        head_ctx = []
        for h in range(H):                 # static, unrolled at trace time
            q = qkv[r0:r0 + T, h * hs:(h + 1) * hs]                       # (T, hs)
            k = qkv[r0:r0 + T, (H + h) * hs:(H + h + 1) * hs]             # (T, hs)
            v = qkv[r0:r0 + T, (2 * H + h) * hs:(2 * H + h + 1) * hs]     # (T, hs)

            # q @ k.T without materializing the transpose.
            wei = lax.dot_general(q, k, (((1,), (1,)), ((), ())),
                                  preferred_element_type=jnp.float32) * scale
            wei = jnp.where(causal, wei, neg_big)                          # masked_fill

            # numerically stable softmax; divide moved off the VALU (exact reciprocal)
            m = jnp.max(wei, axis=-1, keepdims=True)
            e = jnp.exp(wei - m)
            s = jnp.sum(e, axis=-1, keepdims=True)
            p = e * pl.reciprocal(s, approx=False)

            head_ctx.append(jnp.dot(p, v, preferred_element_type=jnp.float32))  # (T, hs)
        ctx_rows.append(jnp.concatenate(head_ctx, axis=-1))    # (T, H*hs) == concat(heads)

    cat = jnp.concatenate(ctx_rows, axis=0)                    # (bt*T, H*hs)

    # Single fused output projection + single hoisted bias add on the whole slab,
    # then one full-tile store.
    y = jnp.dot(cat, wp_ref[...], preferred_element_type=jnp.float32) + bp_ref[...]
    o_ref[...] = y.astype(o_ref.dtype)


def prepare_mha_params(wq, wk, wv, wp, bp):
    """One-time parameter prep: fuse per-head q/k/v weights into one (C, 3*H*hs) matrix.

    Columns are laid out [all Q heads | all K heads | all V heads], head-major inside
    each block, matching the slicing done in the kernel.
    """
    H, C, hs = wq.shape

    def flat(w):                           # (H, C, hs) -> (C, H*hs)
        return jnp.transpose(w, (1, 0, 2)).reshape(C, H * hs)

    wqkv = jnp.concatenate([flat(wq), flat(wk), flat(wv)], axis=1)
    return wqkv, wp, bp


def multi_head_attention(x, wqkv, wp, bp, *, heads=num_heads, batch_tile=None):
    """x: (B, T, C); wqkv: (C, 3*H*hs); wp: (H*hs, C); bp: (1, C) -> (B, T, C)."""
    B, T, C = x.shape
    H = heads
    hs = (wqkv.shape[1] // 3) // H

    # One grid step by default: per-step pipeline overhead (~0.35 us) exceeds this
    # tile's entire compute.  Only split the batch when per-step work is several us.
    if batch_tile is None:
        batch_tile = B
    assert B % batch_tile == 0, "batch_tile must divide B"
    grid = (B // batch_tile,)

    kernel = functools.partial(mha_kernel, heads=H, hs=hs)

    # Output presented as a (B*T, C) slab -> one full-tile store per grid step; the
    # reshape back to (B, T, C) below is metadata-only in XLA.
    # TODO(synk): a truly lane-dense (B, T*C) store would need an in-kernel cross-lane
    # relayout; with a 2 KiB total output the masked 32-lane store cost is negligible.
    out2d = pl.pallas_call(
        kernel,
        out_shape=jax.ShapeDtypeStruct((B * T, C), x.dtype),
        grid_spec=pltpu.PrefetchScalarGridSpec(
            num_scalar_prefetch=0,
            grid=grid,
            in_specs=[
                pl.BlockSpec((batch_tile, T, C), lambda i: (i, 0, 0)),   # x tile
                pl.BlockSpec((C, wqkv.shape[1]), lambda i: (0, 0)),      # fused Wqkv
                pl.BlockSpec((H * hs, C), lambda i: (0, 0)),             # proj weight
                pl.BlockSpec((1, C), lambda i: (0, 0)),                  # proj bias
            ],
            out_specs=pl.BlockSpec((batch_tile * T, C), lambda i: (i, 0)),
        ),
        compiler_params=pltpu.CompilerParams(
            dimension_semantics=("arbitrary",)),
    )(x, wqkv, wp, bp)
    return out2d.reshape(B, T, C)


def reference(x, wq, wk, wv, wp, bp):
    """Pure-JAX reference mirroring the PyTorch forward, for a sanity check."""
    B, T, C = x.shape
    H, _, hs = wq.shape
    causal = jnp.tril(jnp.ones((T, T), dtype=bool))
    outs = []
    for h in range(H):
        q = x @ wq[h]
        k = x @ wk[h]
        v = x @ wv[h]
        wei = (q @ jnp.swapaxes(k, -2, -1)) * (C ** -0.5)
        wei = jnp.where(causal, wei, -jnp.inf)
        wei = jax.nn.softmax(wei, axis=-1)
        outs.append(wei @ v)
    cat = jnp.concatenate(outs, axis=-1)
    return cat @ wp + bp[0]


if __name__ == "__main__":
    key = jax.random.PRNGKey(0)
    kx, kq, kk, kv, kw, kb = jax.random.split(key, 6)

    B, T, C, H, hs = 2, block_size, n_embd, num_heads, head_size

    x = jax.random.normal(kx, (B, T, C), dtype=jnp.float32)

    # Deterministic synthetic parameters (nn.Linear-style uniform init bounds).
    lim_qkv = 1.0 / math.sqrt(C)
    wq = jax.random.uniform(kq, (H, C, hs), jnp.float32, -lim_qkv, lim_qkv)
    wk = jax.random.uniform(kk, (H, C, hs), jnp.float32, -lim_qkv, lim_qkv)
    wv = jax.random.uniform(kv, (H, C, hs), jnp.float32, -lim_qkv, lim_qkv)
    lim_p = 1.0 / math.sqrt(H * hs)
    wp = jax.random.uniform(kw, (H * hs, C), jnp.float32, -lim_p, lim_p)
    bp = jax.random.uniform(kb, (1, C), jnp.float32, -lim_p, lim_p)

    # One-time weight fusion at parameter-prep time (not per forward call).
    wqkv, wp_f, bp_f = prepare_mha_params(wq, wk, wv, wp, bp)
    wqkv = jax.block_until_ready(wqkv)

    out = multi_head_attention(x, wqkv, wp_f, bp_f, heads=H)
    out = jax.block_until_ready(out)

    ref = reference(x, wq, wk, wv, wp, bp)
    assert out.shape == (B, T, C)
    assert jnp.allclose(out, ref, atol=1e-5, rtol=1e-5)

    print("KERNEL_OK")
</pallas_src>

<mosaic_0001>
module attributes {stable_mosaic.version = 11 : i64} {
  func.func @mha_kernel(%arg0: i32, %arg1: memref<2x8x32xf32, #tpu.memory_space<vmem>>, %arg2: memref<32x96xf32, #tpu.memory_space<vmem>>, %arg3: memref<32x32xf32, #tpu.memory_space<vmem>>, %arg4: memref<1x32xf32, #tpu.memory_space<vmem>>, %arg5: memref<16x32xf32, #tpu.memory_space<vmem>>) attributes {dimension_semantics = [#tpu.dimension_semantics<arbitrary>], iteration_bounds = array<i64: 1>, scalar_prefetch = 0 : i64, scratch_operands = 0 : i64, tpu.core_type = #tpu.core_type<tc>, window_params = [{transform_indices = @transform_0, window_bounds = array<i64: 2, 8, 32>}, {pipeline_mode = #tpu.pipeline_mode<synchronous>, transform_indices = @transform_1, window_bounds = array<i64: 32, 96>}, {pipeline_mode = #tpu.pipeline_mode<synchronous>, transform_indices = @transform_2, window_bounds = array<i64: 32, 32>}, {pipeline_mode = #tpu.pipeline_mode<synchronous>, transform_indices = @transform_3, window_bounds = array<i64: 1, 32>}, {transform_indices = @transform_4, window_bounds = array<i64: 16, 32>}]} {
    %c0 = arith.constant 0 : index
    %c0_0 = arith.constant 0 : index
    %c0_1 = arith.constant 0 : index
    %0 = vector.load %arg1[%c0, %c0_0, %c0_1] : memref<2x8x32xf32, #tpu.memory_space<vmem>>, vector<2x8x32xf32>
    %1 = vector.shape_cast %0 : vector<2x8x32xf32> to vector<16x32xf32>
    %c0_2 = arith.constant 0 : index
    %c0_3 = arith.constant 0 : index
    %2 = vector.load %arg2[%c0_2, %c0_3] : memref<32x96xf32, #tpu.memory_space<vmem>>, vector<32x96xf32>
    %cst = arith.constant dense<0.000000e+00> : vector<16x96xf32>
    %3 = tpu.matmul %1, %2, %cst {dimension_numbers = #tpu.dot_dimension_numbers<[1], [0], [0], [1], [0, 0, 1, 1], [], []>} : vector<16x32xf32>, vector<32x96xf32>, vector<16x96xf32> -> vector<16x96xf32>
    %4 = tpu.iota {dimensions = array<i32: 0>} : vector<8x8xi32>
    %5 = tpu.iota {dimensions = array<i32: 1>} : vector<8x8xi32>
    %6 = arith.cmpi sle, %5, %4 : vector<8x8xi32>
    %7 = vector.extract_strided_slice %3 {offsets = [0, 0], sizes = [8, 8], strides = [1, 1]} : vector<16x96xf32> to vector<8x8xf32>
    %8 = vector.extract_strided_slice %3 {offsets = [0, 32], sizes = [8, 8], strides = [1, 1]} : vector<16x96xf32> to vector<8x8xf32>
    %9 = vector.extract_strided_slice %3 {offsets = [0, 64], sizes = [8, 8], strides = [1, 1]} : vector<16x96xf32> to vector<8x8xf32>
    %cst_4 = arith.constant dense<0.000000e+00> : vector<8x8xf32>
    %10 = tpu.matmul %7, %8, %cst_4 {dimension_numbers = #tpu.dot_dimension_numbers<[1], [1], [0], [0], [0, 0, 1, 0], [], []>} : vector<8x8xf32>, vector<8x8xf32>, vector<8x8xf32> -> vector<8x8xf32>
    %cst_5 = arith.constant 0.176776692 : f32
    %11 = vector.broadcast %cst_5 : f32 to vector<8x8xf32>
    %12 = arith.mulf %10, %11 : vector<8x8xf32>
    %cst_6 = arith.constant -1.000000e+30 : f32
    %13 = vector.broadcast %cst_6 : f32 to vector<8x8xf32>
    %14 = arith.select %6, %12, %13 : vector<8x8xi1>, vector<8x8xf32>
    %cst_7 = arith.constant dense<0xFF800000> : vector<8xf32>
    %15 = vector.multi_reduction <maximumf>, %14, %cst_7 [1] : vector<8x8xf32> to vector<8xf32>
    %16 = vector.shape_cast %15 : vector<8xf32> to vector<8x1xf32>
    %17 = vector.broadcast %16 : vector<8x1xf32> to vector<8x8xf32>
    %18 = arith.subf %14, %17 : vector<8x8xf32>
    %19 = math.exp %18 : vector<8x8xf32>
    %cst_8 = arith.constant dense<0.000000e+00> : vector<8xf32>
    %20 = vector.multi_reduction <add>, %19, %cst_8 [1] : vector<8x8xf32> to vector<8xf32>
    %21 = vector.shape_cast %20 : vector<8xf32> to vector<8x1xf32>
    %22 = tpu.reciprocal %21 : vector<8x1xf32> -> vector<8x1xf32>
    %23 = vector.broadcast %22 : vector<8x1xf32> to vector<8x8xf32>
    %24 = arith.mulf %19, %23 : vector<8x8xf32>
    %cst_9 = arith.constant dense<0.000000e+00> : vector<8x8xf32>
    %25 = tpu.matmul %24, %9, %cst_9 {dimension_numbers = #tpu.dot_dimension_numbers<[1], [0], [0], [1], [0, 0, 1, 1], [], []>} : vector<8x8xf32>, vector<8x8xf32>, vector<8x8xf32> -> vector<8x8xf32>
    %26 = vector.extract_strided_slice %3 {offsets = [0, 8], sizes = [8, 8], strides = [1, 1]} : vector<16x96xf32> to vector<8x8xf32>
    %27 = vector.extract_strided_slice %3 {offsets = [0, 40], sizes = [8, 8], strides = [1, 1]} : vector<16x96xf32> to vector<8x8xf32>
    %28 = vector.extract_strided_slice %3 {offsets = [0, 72], sizes = [8, 8], strides = [1, 1]} : vector<16x96xf32> to vector<8x8xf32>
    %cst_10 = arith.constant dense<0.000000e+00> : vector<8x8xf32>
    %29 = tpu.matmul %26, %27, %cst_10 {dimension_numbers = #tpu.dot_dimension_numbers<[1], [1], [0], [0], [0, 0, 1, 0], [], []>} : vector<8x8xf32>, vector<8x8xf32>, vector<8x8xf32> -> vector<8x8xf32>
    %cst_11 = arith.constant 0.176776692 : f32
    %30 = vector.broadcast %cst_11 : f32 to vector<8x8xf32>
    %31 = arith.mulf %29, %30 : vector<8x8xf32>
    %cst_12 = arith.constant -1.000000e+30 : f32
    %32 = vector.broadcast %cst_12 : f32 to vector<8x8xf32>
    %33 = arith.select %6, %31, %32 : vector<8x8xi1>, vector<8x8xf32>
    %cst_13 = arith.constant dense<0xFF800000> : vector<8xf32>
    %34 = vector.multi_reduction <maximumf>, %33, %cst_13 [1] : vector<8x8xf32> to vector<8xf32>
    %35 = vector.shape_cast %34 : vector<8xf32> to vector<8x1xf32>
    %36 = vector.broadcast %35 : vector<8x1xf32> to vector<8x8xf32>
    %37 = arith.subf %33, %36 : vector<8x8xf32>
    %38 = math.exp %37 : vector<8x8xf32>
    %cst_14 = arith.constant dense<0.000000e+00> : vector<8xf32>
    %39 = vector.multi_reduction <add>, %38, %cst_14 [1] : vector<8x8xf32> to vector<8xf32>
    %40 = vector.shape_cast %39 : vector<8xf32> to vector<8x1xf32>
    %41 = tpu.reciprocal %40 : vector<8x1xf32> -> vector<8x1xf32>
    %42 = vector.broadcast %41 : vector<8x1xf32> to vector<8x8xf32>
    %43 = arith.mulf %38, %42 : vector<8x8xf32>
    %cst_15 = arith.constant dense<0.000000e+00> : vector<8x8xf32>
    %44 = tpu.matmul %43, %28, %cst_15 {dimension_numbers = #tpu.dot_dimension_numbers<[1], [0], [0], [1], [0, 0, 1, 1], [], []>} : vector<8x8xf32>, vector<8x8xf32>, vector<8x8xf32> -> vector<8x8xf32>
    %45 = vector.extract_strided_slice %3 {offsets = [0, 16], sizes = [8, 8], strides = [1, 1]} : vector<16x96xf32> to vector<8x8xf32>
    %46 = vector.extract_strided_slice %3 {offsets = [0, 48], sizes = [8, 8], strides = [1, 1]} : vector<16x96xf32> to vector<8x8xf32>
    %47 = vector.extract_strided_slice %3 {offsets = [0, 80], sizes = [8, 8], strides = [1, 1]} : vector<16x96xf32> to vector<8x8xf32>
    %cst_16 = arith.constant dense<0.000000e+00> : vector<8x8xf32>
    %48 = tpu.matmul %45, %46, %cst_16 {dimension_numbers = #tpu.dot_dimension_numbers<[1], [1], [0], [0], [0, 0, 1, 0], [], []>} : vector<8x8xf32>, vector<8x8xf32>, vector<8x8xf32> -> vector<8x8xf32>
    %cst_17 = arith.constant 0.176776692 : f32
    %49 = vector.broadcast %cst_17 : f32 to vector<8x8xf32>
    %50 = arith.mulf %48, %49 : vector<8x8xf32>
    %cst_18 = arith.constant -1.000000e+30 : f32
    %51 = vector.broadcast %cst_18 : f32 to vector<8x8xf32>
    %52 = arith.select %6, %50, %51 : vector<8x8xi1>, vector<8x8xf32>
    %cst_19 = arith.constant dense<0xFF800000> : vector<8xf32>
    %53 = vector.multi_reduction <maximumf>, %52, %cst_19 [1] : vector<8x8xf32> to vector<8xf32>
    %54 = vector.shape_cast %53 : vector<8xf32> to vector<8x1xf32>
    %55 = vector.broadcast %54 : vector<8x1xf32> to vector<8x8xf32>
    %56 = arith.subf %52, %55 : vector<8x8xf32>
    %57 = math.exp %56 : vector<8x8xf32>
    %cst_20 = arith.constant dense<0.000000e+00> : vector<8xf32>
    %58 = vector.multi_reduction <add>, %57, %cst_20 [1] : vector<8x8xf32> to vector<8xf32>
    %59 = vector.shape_cast %58 : vector<8xf32> to vector<8x1xf32>
    %60 = tpu.reciprocal %59 : vector<8x1xf32> -> vector<8x1xf32>
    %61 = vector.broadcast %60 : vector<8x1xf32> to vector<8x8xf32>
    %62 = arith.mulf %57, %61 : vector<8x8xf32>
    %cst_21 = arith.constant dense<0.000000e+00> : vector<8x8xf32>
    %63 = tpu.matmul %62, %47, %cst_21 {dimension_numbers = #tpu.dot_dimension_numbers<[1], [0], [0], [1], [0, 0, 1, 1], [], []>} : vector<8x8xf32>, vector<8x8xf32>, vector<8x8xf32> -> vector<8x8xf32>
    %64 = vector.extract_strided_slice %3 {offsets = [0, 24], sizes = [8, 8], strides = [1, 1]} : vector<16x96xf32> to vector<8x8xf32>
    %65 = vector.extract_strided_slice %3 {offsets = [0, 56], sizes = [8, 8], strides = [1, 1]} : vector<16x96xf32> to vector<8x8xf32>
    %66 = vector.extract_strided_slice %3 {offsets = [0, 88], sizes = [8, 8], strides = [1, 1]} : vector<16x96xf32> to vector<8x8xf32>
    %cst_22 = arith.constant dense<0.000000e+00> : vector<8x8xf32>
    %67 = tpu.matmul %64, %65, %cst_22 {dimension_numbers = #tpu.dot_dimension_numbers<[1], [1], [0], [0], [0, 0, 1, 0], [], []>} : vector<8x8xf32>, vector<8x8xf32>, vector<8x8xf32> -> vector<8x8xf32>
    %cst_23 = arith.constant 0.176776692 : f32
    %68 = vector.broadcast %cst_23 : f32 to vector<8x8xf32>
    %69 = arith.mulf %67, %68 : vector<8x8xf32>
    %cst_24 = arith.constant -1.000000e+30 : f32
    %70 = vector.broadcast %cst_24 : f32 to vector<8x8xf32>
    %71 = arith.select %6, %69, %70 : vector<8x8xi1>, vector<8x8xf32>
    %cst_25 = arith.constant dense<0xFF800000> : vector<8xf32>
    %72 = vector.multi_reduction <maximumf>, %71, %cst_25 [1] : vector<8x8xf32> to vector<8xf32>
    %73 = vector.shape_cast %72 : vector<8xf32> to vector<8x1xf32>
    %74 = vector.broadcast %73 : vector<8x1xf32> to vector<8x8xf32>
    %75 = arith.subf %71, %74 : vector<8x8xf32>
    %76 = math.exp %75 : vector<8x8xf32>
    %cst_26 = arith.constant dense<0.000000e+00> : vector<8xf32>
    %77 = vector.multi_reduction <add>, %76, %cst_26 [1] : vector<8x8xf32> to vector<8xf32>
    %78 = vector.shape_cast %77 : vector<8xf32> to vector<8x1xf32>
    %79 = tpu.reciprocal %78 : vector<8x1xf32> -> vector<8x1xf32>
    %80 = vector.broadcast %79 : vector<8x1xf32> to vector<8x8xf32>
    %81 = arith.mulf %76, %80 : vector<8x8xf32>
    %cst_27 = arith.constant dense<0.000000e+00> : vector<8x8xf32>
    %82 = tpu.matmul %81, %66, %cst_27 {dimension_numbers = #tpu.dot_dimension_numbers<[1], [0], [0], [1], [0, 0, 1, 1], [], []>} : vector<8x8xf32>, vector<8x8xf32>, vector<8x8xf32> -> vector<8x8xf32>
    %83 = tpu.concatenate %25, %44, %63, %82 in 1 : vector<8x8xf32>, vector<8x8xf32>, vector<8x8xf32>, vector<8x8xf32> -> vector<8x32xf32>
    %84 = vector.extract_strided_slice %3 {offsets = [8, 0], sizes = [8, 8], strides = [1, 1]} : vector<16x96xf32> to vector<8x8xf32>
    %85 = vector.extract_strided_slice %3 {offsets = [8, 32], sizes = [8, 8], strides = [1, 1]} : vector<16x96xf32> to vector<8x8xf32>
    %86 = vector.extract_strided_slice %3 {offsets = [8, 64], sizes = [8, 8], strides = [1, 1]} : vector<16x96xf32> to vector<8x8xf32>
    %cst_28 = arith.constant dense<0.000000e+00> : vector<8x8xf32>
    %87 = tpu.matmul %84, %85, %cst_28 {dimension_numbers = #tpu.dot_dimension_numbers<[1], [1], [0], [0], [0, 0, 1, 0], [], []>} : vector<8x8xf32>, vector<8x8xf32>, vector<8x8xf32> -> vector<8x8xf32>
    %cst_29 = arith.constant 0.176776692 : f32
    %88 = vector.broadcast %cst_29 : f32 to vector<8x8xf32>
    %89 = arith.mulf %87, %88 : vector<8x8xf32>
    %cst_30 = arith.constant -1.000000e+30 : f32
    %90 = vector.broadcast %cst_30 : f32 to vector<8x8xf32>
    %91 = arith.select %6, %89, %90 : vector<8x8xi1>, vector<8x8xf32>
    %cst_31 = arith.constant dense<0xFF800000> : vector<8xf32>
    %92 = vector.multi_reduction <maximumf>, %91, %cst_31 [1] : vector<8x8xf32> to vector<8xf32>
    %93 = vector.shape_cast %92 : vector<8xf32> to vector<8x1xf32>
    %94 = vector.broadcast %93 : vector<8x1xf32> to vector<8x8xf32>
    %95 = arith.subf %91, %94 : vector<8x8xf32>
    %96 = math.exp %95 : vector<8x8xf32>
    %cst_32 = arith.constant dense<0.000000e+00> : vector<8xf32>
    %97 = vector.multi_reduction <add>, %96, %cst_32 [1] : vector<8x8xf32> to vector<8xf32>
    %98 = vector.shape_cast %97 : vector<8xf32> to vector<8x1xf32>
    %99 = tpu.reciprocal %98 : vector<8x1xf32> -> vector<8x1xf32>
    %100 = vector.broadcast %99 : vector<8x1xf32> to vector<8x8xf32>
    %101 = arith.mulf %96, %100 : vector<8x8xf32>
    %cst_33 = arith.constant dense<0.000000e+00> : vector<8x8xf32>
    %102 = tpu.matmul %101, %86, %cst_33 {dimension_numbers = #tpu.dot_dimension_numbers<[1], [0], [0], [1], [0, 0, 1, 1], [], []>} : vector<8x8xf32>, vector<8x8xf32>, vector<8x8xf32> -> vector<8x8xf32>
    %103 = vector.extract_strided_slice %3 {offsets = [8, 8], sizes = [8, 8], strides = [1, 1]} : vector<16x96xf32> to vector<8x8xf32>
    %104 = vector.extract_strided_slice %3 {offsets = [8, 40], sizes = [8, 8], strides = [1, 1]} : vector<16x96xf32> to vector<8x8xf32>
    %105 = vector.extract_strided_slice %3 {offsets = [8, 72], sizes = [8, 8], strides = [1, 1]} : vector<16x96xf32> to vector<8x8xf32>
    %cst_34 = arith.constant dense<0.000000e+00> : vector<8x8xf32>
    %106 = tpu.matmul %103, %104, %cst_34 {dimension_numbers = #tpu.dot_dimension_numbers<[1], [1], [0], [0], [0, 0, 1, 0], [], []>} : vector<8x8xf32>, vector<8x8xf32>, vector<8x8xf32> -> vector<8x8xf32>
    %cst_35 = arith.constant 0.176776692 : f32
    %107 = vector.broadcast %cst_35 : f32 to vector<8x8xf32>
    %108 = arith.mulf %106, %107 : vector<8x8xf32>
    %cst_36 = arith.constant -1.000000e+30 : f32
    %109 = vector.broadcast %cst_36 : f32 to vector<8x8xf32>
    %110 = arith.select %6, %108, %109 : vector<8x8xi1>, vector<8x8xf32>
    %cst_37 = arith.constant dense<0xFF800000> : vector<8xf32>
    %111 = vector.multi_reduction <maximumf>, %110, %cst_37 [1] : vector<8x8xf32> to vector<8xf32>
    %112 = vector.shape_cast %111 : vector<8xf32> to vector<8x1xf32>
    %113 = vector.broadcast %112 : vector<8x1xf32> to vector<8x8xf32>
    %114 = arith.subf %110, %113 : vector<8x8xf32>
    %115 = math.exp %114 : vector<8x8xf32>
    %cst_38 = arith.constant dense<0.000000e+00> : vector<8xf32>
    %116 = vector.multi_reduction <add>, %115, %cst_38 [1] : vector<8x8xf32> to vector<8xf32>
    %117 = vector.shape_cast %116 : vector<8xf32> to vector<8x1xf32>
    %118 = tpu.reciprocal %117 : vector<8x1xf32> -> vector<8x1xf32>
    %119 = vector.broadcast %118 : vector<8x1xf32> to vector<8x8xf32>
    %120 = arith.mulf %115, %119 : vector<8x8xf32>
    %cst_39 = arith.constant dense<0.000000e+00> : vector<8x8xf32>
    %121 = tpu.matmul %120, %105, %cst_39 {dimension_numbers = #tpu.dot_dimension_numbers<[1], [0], [0], [1], [0, 0, 1, 1], [], []>} : vector<8x8xf32>, vector<8x8xf32>, vector<8x8xf32> -> vector<8x8xf32>
    %122 = vector.extract_strided_slice %3 {offsets = [8, 16], sizes = [8, 8], strides = [1, 1]} : vector<16x96xf32> to vector<8x8xf32>
    %123 = vector.extract_strided_slice %3 {offsets = [8, 48], sizes = [8, 8], strides = [1, 1]} : vector<16x96xf32> to vector<8x8xf32>
    %124 = vector.extract_strided_slice %3 {offsets = [8, 80], sizes = [8, 8], strides = [1, 1]} : vector<16x96xf32> to vector<8x8xf32>
    %cst_40 = arith.constant dense<0.000000e+00> : vector<8x8xf32>
    %125 = tpu.matmul %122, %123, %cst_40 {dimension_numbers = #tpu.dot_dimension_numbers<[1], [1], [0], [0], [0, 0, 1, 0], [], []>} : vector<8x8xf32>, vector<8x8xf32>, vector<8x8xf32> -> vector<8x8xf32>
    %cst_41 = arith.constant 0.176776692 : f32
    %126 = vector.broadcast %cst_41 : f32 to vector<8x8xf32>
    %127 = arith.mulf %125, %126 : vector<8x8xf32>
    %cst_42 = arith.constant -1.000000e+30 : f32
    %128 = vector.broadcast %cst_42 : f32 to vector<8x8xf32>
    %129 = arith.select %6, %127, %128 : vector<8x8xi1>, vector<8x8xf32>
    %cst_43 = arith.constant dense<0xFF800000> : vector<8xf32>
    %130 = vector.multi_reduction <maximumf>, %129, %cst_43 [1] : vector<8x8xf32> to vector<8xf32>
    %131 = vector.shape_cast %130 : vector<8xf32> to vector<8x1xf32>
    %132 = vector.broadcast %131 : vector<8x1xf32> to vector<8x8xf32>
    %133 = arith.subf %129, %132 : vector<8x8xf32>
    %134 = math.exp %133 : vector<8x8xf32>
    %cst_44 = arith.constant dense<0.000000e+00> : vector<8xf32>
    %135 = vector.multi_reduction <add>, %134, %cst_44 [1] : vector<8x8xf32> to vector<8xf32>
    %136 = vector.shape_cast %135 : vector<8xf32> to vector<8x1xf32>
    %137 = tpu.reciprocal %136 : vector<8x1xf32> -> vector<8x1xf32>
    %138 = vector.broadcast %137 : vector<8x1xf32> to vector<8x8xf32>
    %139 = arith.mulf %134, %138 : vector<8x8xf32>
    %cst_45 = arith.constant dense<0.000000e+00> : vector<8x8xf32>
    %140 = tpu.matmul %139, %124, %cst_45 {dimension_numbers = #tpu.dot_dimension_numbers<[1], [0], [0], [1], [0, 0, 1, 1], [], []>} : vector<8x8xf32>, vector<8x8xf32>, vector<8x8xf32> -> vector<8x8xf32>
    %141 = vector.extract_strided_slice %3 {offsets = [8, 24], sizes = [8, 8], strides = [1, 1]} : vector<16x96xf32> to vector<8x8xf32>
    %142 = vector.extract_strided_slice %3 {offsets = [8, 56], sizes = [8, 8], strides = [1, 1]} : vector<16x96xf32> to vector<8x8xf32>
    %143 = vector.extract_strided_slice %3 {offsets = [8, 88], sizes = [8, 8], strides = [1, 1]} : vector<16x96xf32> to vector<8x8xf32>
    %cst_46 = arith.constant dense<0.000000e+00> : vector<8x8xf32>
    %144 = tpu.matmul %141, %142, %cst_46 {dimension_numbers = #tpu.dot_dimension_numbers<[1], [1], [0], [0], [0, 0, 1, 0], [], []>} : vector<8x8xf32>, vector<8x8xf32>, vector<8x8xf32> -> vector<8x8xf32>
    %cst_47 = arith.constant 0.176776692 : f32
    %145 = vector.broadcast %cst_47 : f32 to vector<8x8xf32>
    %146 = arith.mulf %144, %145 : vector<8x8xf32>
    %cst_48 = arith.constant -1.000000e+30 : f32
    %147 = vector.broadcast %cst_48 : f32 to vector<8x8xf32>
    %148 = arith.select %6, %146, %147 : vector<8x8xi1>, vector<8x8xf32>
    %cst_49 = arith.constant dense<0xFF800000> : vector<8xf32>
    %149 = vector.multi_reduction <maximumf>, %148, %cst_49 [1] : vector<8x8xf32> to vector<8xf32>
    %150 = vector.shape_cast %149 : vector<8xf32> to vector<8x1xf32>
    %151 = vector.broadcast %150 : vector<8x1xf32> to vector<8x8xf32>
    %152 = arith.subf %148, %151 : vector<8x8xf32>
    %153 = math.exp %152 : vector<8x8xf32>
    %cst_50 = arith.constant dense<0.000000e+00> : vector<8xf32>
    %154 = vector.multi_reduction <add>, %153, %cst_50 [1] : vector<8x8xf32> to vector<8xf32>
    %155 = vector.shape_cast %154 : vector<8xf32> to vector<8x1xf32>
    %156 = tpu.reciprocal %155 : vector<8x1xf32> -> vector<8x1xf32>
    %157 = vector.broadcast %156 : vector<8x1xf32> to vector<8x8xf32>
    %158 = arith.mulf %153, %157 : vector<8x8xf32>
    %cst_51 = arith.constant dense<0.000000e+00> : vector<8x8xf32>
    %159 = tpu.matmul %158, %143, %cst_51 {dimension_numbers = #tpu.dot_dimension_numbers<[1], [0], [0], [1], [0, 0, 1, 1], [], []>} : vector<8x8xf32>, vector<8x8xf32>, vector<8x8xf32> -> vector<8x8xf32>
    %160 = tpu.concatenate %102, %121, %140, %159 in 1 : vector<8x8xf32>, vector<8x8xf32>, vector<8x8xf32>, vector<8x8xf32> -> vector<8x32xf32>
    %161 = tpu.concatenate %83, %160 in 0 : vector<8x32xf32>, vector<8x32xf32> -> vector<16x32xf32>
    %c0_52 = arith.constant 0 : index
    %c0_53 = arith.constant 0 : index
    %162 = vector.load %arg3[%c0_52, %c0_53] : memref<32x32xf32, #tpu.memory_space<vmem>>, vector<32x32xf32>
    %cst_54 = arith.constant dense<0.000000e+00> : vector<16x32xf32>
    %163 = tpu.matmul %161, %162, %cst_54 {dimension_numbers = #tpu.dot_dimension_numbers<[1], [0], [0], [1], [0, 0, 1, 1], [], []>} : vector<16x32xf32>, vector<32x32xf32>, vector<16x32xf32> -> vector<16x32xf32>
    %c0_55 = arith.constant 0 : index
    %c0_56 = arith.constant 0 : index
    %164 = vector.load %arg4[%c0_55, %c0_56] : memref<1x32xf32, #tpu.memory_space<vmem>>, vector<1x32xf32>
    %165 = vector.broadcast %164 : vector<1x32xf32> to vector<16x32xf32>
    %166 = arith.addf %163, %165 : vector<16x32xf32>
    %c0_57 = arith.constant 0 : index
    %c0_58 = arith.constant 0 : index
    %167 = vector.load %arg5[%c0_57, %c0_58] : memref<16x32xf32, #tpu.memory_space<vmem>>, vector<16x32xf32>
    tpu.vector_store %arg5[%c0_57, %c0_58], %166 {strides = array<i32>} : memref<16x32xf32, #tpu.memory_space<vmem>>, vector<16x32xf32>,
    return
  }
  func.func @transform_0(%arg0: i32) -> (i32, i32, i32) {
    %c0_i32 = arith.constant 0 : i32
    %c0_i32_0 = arith.constant 0 : i32
    %c0_i32_1 = arith.constant 0 : i32
    return %arg0, %c0_i32, %c0_i32_0 : i32, i32, i32
  }
  func.func @transform_1(%arg0: i32) -> (i32, i32) {
    %c0_i32 = arith.constant 0 : i32
    %c0_i32_0 = arith.constant 0 : i32
    %c0_i32_1 = arith.constant 0 : i32
    return %c0_i32, %c0_i32_0 : i32, i32
  }
  func.func @transform_2(%arg0: i32) -> (i32, i32) {
    %c0_i32 = arith.constant 0 : i32
    %c0_i32_0 = arith.constant 0 : i32
    %c0_i32_1 = arith.constant 0 : i32
    return %c0_i32, %c0_i32_0 : i32, i32
  }
  func.func @transform_3(%arg0: i32) -> (i32, i32) {
    %c0_i32 = arith.constant 0 : i32
    %c0_i32_0 = arith.constant 0 : i32
    %c0_i32_1 = arith.constant 0 : i32
    return %c0_i32, %c0_i32_0 : i32, i32
  }
  func.func @transform_4(%arg0: i32) -> (i32, i32) {
    %c0_i32 = arith.constant 0 : i32
    %c0_i32_0 = arith.constant 0 : i32
    return %arg0, %c0_i32 : i32, i32
  }
}

</mosaic_0001>

<llo_original>
// kernel: tpu_custom_call.1
$region0: #{tpu_custom_call.1}
  #allocation0 [shape = 'u32[]', space=smem, size = 0x4, offset = 0x4, fixed_abs, tag = 'smem constant byte address 0x4 - core index']
  #allocation1 [shape = 'u32[144,128]{1,0:T(1,128)}', space=vmem, size = 0x12000, scoped, tag = 'internal scratch']
  %s0 = inlined_call_operand.hbm [shape: f32[2,8,32], index: 0, kind: input, shape index: {}]
  %s1 = inlined_call_operand.hbm [shape: f32[32,96], index: 1, kind: input, shape index: {}]
  %s2 = inlined_call_operand.hbm [shape: f32[32,32], index: 2, kind: input, shape index: {}]
  %s3 = inlined_call_operand.vmem [shape: f32[1,32], index: 3, kind: input, shape index: {}]
  %s4 = inlined_call_operand.hbm [shape: f32[16,32], index: 4, kind: output, shape index: {}]
  %s5 = sld [smem:[#allocation0]]
  $region38: #{tpu_custom_call.1} parent=0
    _
  %s7 = ssub.s32 1, %s5
  %s8 = scalar_select 0, %s7, %s5
  $region1: #{tpu_custom_call.1} parent=0
    #allocation2 [shape = 'u8[8192]{0}', space=vmem, size = 0x2000, scoped, tag = 'input window, operand 0, single buffered']
    #allocation3 [shape = 's32[1]{0}', space=sflag, size = 0x4, scoped, tag = 'scoped memory for tpu_custom_call.1']
    #allocation4 [shape = 's32[1]{0}', space=sflag, size = 0x4, scoped, tag = 'scoped memory for tpu_custom_call.1']
    #allocation5 [shape = 'u8[16384]{0}', space=vmem, size = 0x4000, scoped, tag = 'input window, operand 1, single buffered']
    #allocation6 [shape = 's32[1]{0}', space=sflag, size = 0x4, scoped, tag = 'scoped memory for tpu_custom_call.1']
    #allocation7 [shape = 'u8[16384]{0}', space=vmem, size = 0x4000, scoped, tag = 'input window, operand 2, single buffered']
    #allocation8 [shape = 'u8[8192]{0}', space=vmem, size = 0x2000, scoped, tag = 'output window, operand 0, single buffered']
    %9 = vsyncpa [#allocation3], 0
    %10 = vsyncpa [#allocation6], 0
    %11 = vsyncpa [#allocation4], 0
    // Predicated region
    $region2: #{tpu_custom_call.1} parent=1 // pred_check
      _
    $region3: #{tpu_custom_call.1} parent=1 // pred_check_branch
      %13 = sbr.rel (0) target = $region5
    $region4: #{tpu_custom_call.1} parent=1 // pred_region
      %s15 = ssub.s32 256, 256
      %16 = vsyncadd [#allocation3], %s15
      %s17 = sshll.u32 [#allocation2], 4
      %s18 = int_to_ptr.vmem [resolvable:$true] %s17
      %23 = dma.hbm_to_vmem [thread:$0]  %s0, 256, %s18, [#allocation3], 128, 128, 8
    $region5: #{tpu_custom_call.1} parent=1 // pred_fallthru
      _
    // Predicated region
    $region6: #{tpu_custom_call.1} parent=1 // pred_check
      _
    $region7: #{tpu_custom_call.1} parent=1 // pred_check_branch
      %25 = sbr.rel (0) target = $region9
    $region8: #{tpu_custom_call.1} parent=1 // pred_region
      %s27 = ssub.s32 512, 512
      %28 = vsyncadd [#allocation6], %s27
      %s29 = sshll.u32 [#allocation5], 4
      %s30 = int_to_ptr.vmem [resolvable:$true] %s29
      %35 = dma.hbm_to_vmem [thread:$0]  %s1, 512, %s30, [#allocation6], 128, 128, 8
    $region9: #{tpu_custom_call.1} parent=1 // pred_fallthru
      _
    // Predicated region
    $region10: #{tpu_custom_call.1} parent=1 // pred_check
      _
    $region11: #{tpu_custom_call.1} parent=1 // pred_check_branch
      %37 = sbr.rel (0) target = $region13
    $region12: #{tpu_custom_call.1} parent=1 // pred_region
      %s39 = ssub.s32 512, 512
      %40 = vsyncadd [#allocation6], %s39
      %s41 = sshll.u32 [#allocation7], 4
      %s42 = int_to_ptr.vmem [resolvable:$true] %s41
      %47 = dma.hbm_to_vmem [thread:$0]  %s2, 512, %s42, [#allocation6], 128, 128, 8
    $region13: #{tpu_custom_call.1} parent=1 // pred_fallthru
      _
    // Predicated region
    $region14: #{tpu_custom_call.1} parent=1 // pred_check
      _
    $region15: #{tpu_custom_call.1} parent=1 // pred_check_branch
      %49 = sbr.rel (0) target = $region17
    $region16: #{tpu_custom_call.1} parent=1 // pred_region
      _
    $region17: #{tpu_custom_call.1} parent=1 // pred_fallthru
      _
    // Predicated region
    $region18: #{tpu_custom_call.1} parent=1 // pred_check
      _
    $region19: #{tpu_custom_call.1} parent=1 // pred_check_branch
      %51 = sbr.rel (0) target = $region21
    $region20: #{tpu_custom_call.1} parent=1 // pred_region
      %52 = dma.done [#allocation3], 256
    $region21: #{tpu_custom_call.1} parent=1 // pred_fallthru
      _
    // Predicated region
    $region22: #{tpu_custom_call.1} parent=1 // pred_check
      _
    $region23: #{tpu_custom_call.1} parent=1 // pred_check_branch
      %54 = sbr.rel (0) target = $region25
    $region24: #{tpu_custom_call.1} parent=1 // pred_region
      %55 = dma.done [#allocation6], 512
    $region25: #{tpu_custom_call.1} parent=1 // pred_fallthru
      _
    // Predicated region
    $region26: #{tpu_custom_call.1} parent=1 // pred_check
      _
    $region27: #{tpu_custom_call.1} parent=1 // pred_check_branch
      %57 = sbr.rel (0) target = $region29
    $region28: #{tpu_custom_call.1} parent=1 // pred_region
      %58 = dma.done [#allocation6], 512
    $region29: #{tpu_custom_call.1} parent=1 // pred_fallthru
      _
    %v59 = vld [vmem:[#allocation2] sm:$0xff]
    %v60 = vld [vmem:[#allocation2 + $0x8] sm:$0xff]
    %v61 = vld [vmem:[#allocation5] sm:$0xff]
    %v62 = vld [vmem:[#allocation5 + $0x8] sm:$0xff]
    %v63 = vld [vmem:[#allocation5 + $0x10] sm:$0xff]
    %v64 = vld [vmem:[#allocation5 + $0x18] sm:$0xff]
    %vm65 = vcmask 261120
    %v67 = vsel %vm65, %v59, 0
    %v70 = vsel %vm65, %v60, 0
    %72 = vmatprep.subr.mxu0 0.0
    %73 = vmatpush1.msra.mxu0 0.0
    %74 = vmatprep.subr.mxu0 0.0
    %75 = vmatpush1.msra.mxu0 0.0
    %76 = vmatprep.subr.mxu0 0.0
    %77 = vmatpush1.msra.mxu0 0.0
    %78 = vmatprep.subr.mxu0 0.0
    %79 = vmatpush1.msra.mxu0 0.0
    %80 = vmatprep.subr.mxu0 0.0
    %81 = vmatpush1.msra.mxu0 0.0
    %82 = vmatprep.subr.mxu0 0.0
    %83 = vmatpush1.msra.mxu0 0.0
    %84 = vmatprep.subr.mxu0 0.0
    %85 = vmatpush1.msra.mxu0 0.0
    %86 = vmatprep.subr.mxu0 0.0
    %87 = vmatpush1.msra.mxu0 0.0
    %88 = vmatprep.subr.mxu0 0.0
    %89 = vmatpush1.msra.mxu0 0.0
    %90 = vmatprep.subr.mxu0 0.0
    %91 = vmatpush1.msra.mxu0 0.0
    %92 = vmatprep.subr.mxu0 0.0
    %93 = vmatpush1.msra.mxu0 0.0
    %94 = vmatprep.subr.mxu0 0.0
    %95 = vmatpush1.msra.mxu0 0.0
    %96 = vmatprep.subr.mxu0 0.0
    %97 = vmatpush1.msra.mxu0 %v64
    %98 = vmatprep.subr.mxu0 0.0
    %99 = vmatpush1.msra.mxu0 %v63
    %100 = vmatprep.subr.mxu0 0.0
    %101 = vmatpush1.msra.mxu0 %v62
    %102 = vmatprep.subr.mxu0 0.0
    %103 = vmatpush1.msra.mxu0 %v61
    %104 = vmatprep.subr.mxu0 0.0
    %105 = vmatpush2.msra.mxu0 0.0
    %106 = vmatprep.subr.mxu0 0.0
    %107 = vmatpush2.msra.mxu0 0.0
    %108 = vmatprep.subr.mxu0 0.0
    %109 = vmatpush2.msra.mxu0 0.0
    %110 = vmatprep.subr.mxu0 0.0
    %111 = vmatpush2.msra.mxu0 0.0
    %112 = vmatprep.subr.mxu0 0.0
    %113 = vmatpush2.msra.mxu0 0.0
    %114 = vmatprep.subr.mxu0 0.0
    %115 = vmatpush2.msra.mxu0 0.0
    %116 = vmatprep.subr.mxu0 0.0
    %117 = vmatpush2.msra.mxu0 0.0
    %118 = vmatprep.subr.mxu0 0.0
    %119 = vmatpush2.msra.mxu0 0.0
    %120 = vmatprep.subr.mxu0 0.0
    %121 = vmatpush2.msra.mxu0 0.0
    %122 = vmatprep.subr.mxu0 0.0
    %123 = vmatpush2.msra.mxu0 0.0
    %124 = vmatprep.subr.mxu0 0.0
    %125 = vmatpush2.msra.mxu0 0.0
    %126 = vmatprep.subr.mxu0 0.0
    %127 = vmatpush2.msra.mxu0 0.0
    %128 = vmatprep.subr.mxu0 0.0
    %129 = vmatpush2.msra.mxu0 0.0
    %130 = vmatprep.subr.mxu0 0.0
    %131 = vmatpush2.msra.mxu0 0.0
    %132 = vmatprep.subr.mxu0 0.0
    %133 = vmatpush2.msra.mxu0 0.0
    %134 = vmatprep.subr.mxu0 0.0
    %135 = vmatpush2.msra.mxu0 0.0
    %136 = vmatprep.mubr.f32.mxu0 0.0
    %137 = vmatmul.mubr.f32.gmra.mxu0 %v67
    %v138 = vpop.f32.mrf.mxu0
    %v139 = vadd.f32 0.0, %v138
    %v140 = vpop.f32.mrf.mxu0
    %141 = vmatprep.mubr.f32.mxu0 0.0
    %142 = vmatmul.mubr.f32.gmra.mxu0 %v70
    %v143 = vpop.f32.mrf.mxu0
    %v144 = vadd.f32 0.0, %v143
    %v145 = vpop.f32.mrf.mxu0
    %146 = vdwg.mxu0
    %v147 = vlaneseq
    %v148 = vshrl.u32 %v147, 7
    %v149 = vlaneseq
    %v150 = vand.u32 %v149, 127
    %vm151 = vcmp.le.s32.totalorder %v150, %v148
    %153 = vrot.lane.b32.xlu0 %v139, 96
    %v154 = vpop.permute.xlu0 %153
    %vm155 = vcmask 64512
    %v156 = vsel %vm155, %v139, 0
    %v158 = vsel %vm155, %v154, 0
    %160 = vmatprep.subr.mxu0 0.0
    %161 = vmatpush1.xpose.msra.mxu0 0.0
    %162 = vmatprep.subr.mxu0 0.0
    %163 = vmatpush1.xpose.msra.mxu0 0.0
    %164 = vmatprep.subr.mxu0 0.0
    %165 = vmatpush1.xpose.msra.mxu0 0.0
    %166 = vmatprep.subr.mxu0 0.0
    %167 = vmatpush1.xpose.msra.mxu0 0.0
    %168 = vmatprep.subr.mxu0 0.0
    %169 = vmatpush1.xpose.msra.mxu0 0.0
    %170 = vmatprep.subr.mxu0 0.0
    %171 = vmatpush1.xpose.msra.mxu0 0.0
    %172 = vmatprep.subr.mxu0 0.0
    %173 = vmatpush1.xpose.msra.mxu0 0.0
    %174 = vmatprep.subr.mxu0 0.0
    %175 = vmatpush1.xpose.msra.mxu0 0.0
    %176 = vmatprep.subr.mxu0 0.0
    %177 = vmatpush1.xpose.msra.mxu0 0.0
    %178 = vmatprep.subr.mxu0 0.0
    %179 = vmatpush1.xpose.msra.mxu0 0.0
    %180 = vmatprep.subr.mxu0 0.0
    %181 = vmatpush1.xpose.msra.mxu0 0.0
    %182 = vmatprep.subr.mxu0 0.0
    %183 = vmatpush1.xpose.msra.mxu0 0.0
    %184 = vmatprep.subr.mxu0 0.0
    %185 = vmatpush1.xpose.msra.mxu0 0.0
    %186 = vmatprep.subr.mxu0 0.0
    %187 = vmatpush1.xpose.msra.mxu0 0.0
    %188 = vmatprep.subr.mxu0 0.0
    %189 = vmatpush1.xpose.msra.mxu0 0.0
    %190 = vmatprep.subr.mxu0 0.0
    %191 = vmatpush1.xpose.msra.mxu0 %v158
    %192 = vmatprep.subr.mxu0 0.0
    %193 = vmatpush2.xpose.msra.mxu0 0.0
    %194 = vmatprep.subr.mxu0 0.0
    %195 = vmatpush2.xpose.msra.mxu0 0.0
    %196 = vmatprep.subr.mxu0 0.0
    %197 = vmatpush2.xpose.msra.mxu0 0.0
    %198 = vmatprep.subr.mxu0 0.0
    %199 = vmatpush2.xpose.msra.mxu0 0.0
    %200 = vmatprep.subr.mxu0 0.0
    %201 = vmatpush2.xpose.msra.mxu0 0.0
    %202 = vmatprep.subr.mxu0 0.0
    %203 = vmatpush2.xpose.msra.mxu0 0.0
    %204 = vmatprep.subr.mxu0 0.0
    %205 = vmatpush2.xpose.msra.mxu0 0.0
    %206 = vmatprep.subr.mxu0 0.0
    %207 = vmatpush2.xpose.msra.mxu0 0.0
    %208 = vmatprep.subr.mxu0 0.0
    %209 = vmatpush2.xpose.msra.mxu0 0.0
    %210 = vmatprep.subr.mxu0 0.0
    %211 = vmatpush2.xpose.msra.mxu0 0.0
    %212 = vmatprep.subr.mxu0 0.0
    %213 = vmatpush2.xpose.msra.mxu0 0.0
    %214 = vmatprep.subr.mxu0 0.0
    %215 = vmatpush2.xpose.msra.mxu0 0.0
    %216 = vmatprep.subr.mxu0 0.0
    %217 = vmatpush2.xpose.msra.mxu0 0.0
    %218 = vmatprep.subr.mxu0 0.0
    %219 = vmatpush2.xpose.msra.mxu0 0.0
    %220 = vmatprep.subr.mxu0 0.0
    %221 = vmatpush2.xpose.msra.mxu0 0.0
    %222 = vmatprep.subr.mxu0 0.0
    %223 = vmatpush2.xpose.msra.mxu0 0.0
    %224 = vmatprep.mubr.f32.mxu0 0.0
    %225 = vmatmul.mubr.f32.gmra.mxu0 %v156
    %v226 = vpop.f32.mrf.mxu0
    %v227 = vadd.f32 0.0, %v226
    %v228 = vpop.f32.mrf.mxu0
    %229 = vdwg.mxu0
    %v230 = vmul.f32 %v227, 0.17677669
    %v231 = vsel %vm151, %v230, -1e+30
    %v232 = vsel %vm155, %v231, -inf
    %233 = vmax.xlane.f32.xlu0 %v232
    %v234 = vpop.xlane.xlu0 %233
    %v235 = vsub.f32 %v231, %v234
    %v236 = vmul.f32 %v235, 1.442695
    %v237 = vpow.pop %v236
    %v238 = vsel %vm155, %v237, 0.0
    %239 = vadd.xlane.f32.xlu0 %v238
    %v240 = vpop.xlane.xlu0 %239
    %v241 = vrcp.pop %v240
    %v242 = vmul.f32 %v237, %v241
    %243 = vrot.lane.b32.xlu0 %v139, 64
    %v244 = vpop.permute.xlu0 %243
    %v247 = vsel %vm155, %v242, 0
    %249 = vmatprep.subr.mxu0 0.0
    %250 = vmatpush1.msra.mxu0 0.0
    %251 = vmatprep.subr.mxu0 0.0
    %252 = vmatpush1.msra.mxu0 0.0
    %253 = vmatprep.subr.mxu0 0.0
    %254 = vmatpush1.msra.mxu0 0.0
    %255 = vmatprep.subr.mxu0 0.0
    %256 = vmatpush1.msra.mxu0 0.0
    %257 = vmatprep.subr.mxu0 0.0
    %258 = vmatpush1.msra.mxu0 0.0
    %259 = vmatprep.subr.mxu0 0.0
    %260 = vmatpush1.msra.mxu0 0.0
    %261 = vmatprep.subr.mxu0 0.0
    %262 = vmatpush1.msra.mxu0 0.0
    %263 = vmatprep.subr.mxu0 0.0
    %264 = vmatpush1.msra.mxu0 0.0
    %265 = vmatprep.subr.mxu0 0.0
    %266 = vmatpush1.msra.mxu0 0.0
    %267 = vmatprep.subr.mxu0 0.0
    %268 = vmatpush1.msra.mxu0 0.0
    %269 = vmatprep.subr.mxu0 0.0
    %270 = vmatpush1.msra.mxu0 0.0
    %271 = vmatprep.subr.mxu0 0.0
    %272 = vmatpush1.msra.mxu0 0.0
    %273 = vmatprep.subr.mxu0 0.0
    %274 = vmatpush1.msra.mxu0 0.0
    %275 = vmatprep.subr.mxu0 0.0
    %276 = vmatpush1.msra.mxu0 0.0
    %277 = vmatprep.subr.mxu0 0.0
    %278 = vmatpush1.msra.mxu0 0.0
    %279 = vmatprep.subr.mxu0 0.0
    %280 = vmatpush1.msra.mxu0 %v244
    %281 = vmatprep.subr.mxu0 0.0
    %282 = vmatpush2.msra.mxu0 0.0
    %283 = vmatprep.subr.mxu0 0.0
    %284 = vmatpush2.msra.mxu0 0.0
    %285 = vmatprep.subr.mxu0 0.0
    %286 = vmatpush2.msra.mxu0 0.0
    %287 = vmatprep.subr.mxu0 0.0
    %288 = vmatpush2.msra.mxu0 0.0
    %289 = vmatprep.subr.mxu0 0.0
    %290 = vmatpush2.msra.mxu0 0.0
    %291 = vmatprep.subr.mxu0 0.0
    %292 = vmatpush2.msra.mxu0 0.0
    %293 = vmatprep.subr.mxu0 0.0
    %294 = vmatpush2.msra.mxu0 0.0
    %295 = vmatprep.subr.mxu0 0.0
    %296 = vmatpush2.msra.mxu0 0.0
    %297 = vmatprep.subr.mxu0 0.0
    %298 = vmatpush2.msra.mxu0 0.0
    %299 = vmatprep.subr.mxu0 0.0
    %300 = vmatpush2.msra.mxu0 0.0
    %301 = vmatprep.subr.mxu0 0.0
    %302 = vmatpush2.msra.mxu0 0.0
    %303 = vmatprep.subr.mxu0 0.0
    %304 = vmatpush2.msra.mxu0 0.0
    %305 = vmatprep.subr.mxu0 0.0
    %306 = vmatpush2.msra.mxu0 0.0
    %307 = vmatprep.subr.mxu0 0.0
    %308 = vmatpush2.msra.mxu0 0.0
    %309 = vmatprep.subr.mxu0 0.0
    %310 = vmatpush2.msra.mxu0 0.0
    %311 = vmatprep.subr.mxu0 0.0
    %312 = vmatpush2.msra.mxu0 0.0
    %313 = vmatprep.mubr.f32.mxu0 0.0
    %314 = vmatmul.mubr.f32.gmra.mxu0 %v247
    %v315 = vpop.f32.mrf.mxu0
    %v316 = vadd.f32 0.0, %v315
    %v317 = vpop.f32.mrf.mxu0
    %318 = vdwg.mxu0
    %319 = vrot.lane.b32.xlu0 %v139, 120
    %v320 = vpop.permute.xlu0 %319
    %321 = vrot.lane.b32.xlu0 %v139, 88
    %v322 = vpop.permute.xlu0 %321
    %v323 = vsel %vm155, %v320, 0
    %v325 = vsel %vm155, %v322, 0
    %327 = vmatprep.subr.mxu0 0.0
    %328 = vmatpush1.xpose.msra.mxu0 0.0
    %329 = vmatprep.subr.mxu0 0.0
    %330 = vmatpush1.xpose.msra.mxu0 0.0
    %331 = vmatprep.subr.mxu0 0.0
    %332 = vmatpush1.xpose.msra.mxu0 0.0
    %333 = vmatprep.subr.mxu0 0.0
    %334 = vmatpush1.xpose.msra.mxu0 0.0
    %335 = vmatprep.subr.mxu0 0.0
    %336 = vmatpush1.xpose.msra.mxu0 0.0
    %337 = vmatprep.subr.mxu0 0.0
    %338 = vmatpush1.xpose.msra.mxu0 0.0
    %339 = vmatprep.subr.mxu0 0.0
    %340 = vmatpush1.xpose.msra.mxu0 0.0
    %341 = vmatprep.subr.mxu0 0.0
    %342 = vmatpush1.xpose.msra.mxu0 0.0
    %343 = vmatprep.subr.mxu0 0.0
    %344 = vmatpush1.xpose.msra.mxu0 0.0
    %345 = vmatprep.subr.mxu0 0.0
    %346 = vmatpush1.xpose.msra.mxu0 0.0
    %347 = vmatprep.subr.mxu0 0.0
    %348 = vmatpush1.xpose.msra.mxu0 0.0
    %349 = vmatprep.subr.mxu0 0.0
    %350 = vmatpush1.xpose.msra.mxu0 0.0
    %351 = vmatprep.subr.mxu0 0.0
    %352 = vmatpush1.xpose.msra.mxu0 0.0
    %353 = vmatprep.subr.mxu0 0.0
    %354 = vmatpush1.xpose.msra.mxu0 0.0
    %355 = vmatprep.subr.mxu0 0.0
    %356 = vmatpush1.xpose.msra.mxu0 0.0
    %357 = vmatprep.subr.mxu0 0.0
    %358 = vmatpush1.xpose.msra.mxu0 %v325
    %359 = vmatprep.subr.mxu0 0.0
    %360 = vmatpush2.xpose.msra.mxu0 0.0
    %361 = vmatprep.subr.mxu0 0.0
    %362 = vmatpush2.xpose.msra.mxu0 0.0
    %363 = vmatprep.subr.mxu0 0.0
    %364 = vmatpush2.xpose.msra.mxu0 0.0
    %365 = vmatprep.subr.mxu0 0.0
    %366 = vmatpush2.xpose.msra.mxu0 0.0
    %367 = vmatprep.subr.mxu0 0.0
    %368 = vmatpush2.xpose.msra.mxu0 0.0
    %369 = vmatprep.subr.mxu0 0.0
    %370 = vmatpush2.xpose.msra.mxu0 0.0
    %371 = vmatprep.subr.mxu0 0.0
    %372 = vmatpush2.xpose.msra.mxu0 0.0
    %373 = vmatprep.subr.mxu0 0.0
    %374 = vmatpush2.xpose.msra.mxu0 0.0
    %375 = vmatprep.subr.mxu0 0.0
    %376 = vmatpush2.xpose.msra.mxu0 0.0
    %377 = vmatprep.subr.mxu0 0.0
    %378 = vmatpush2.xpose.msra.mxu0 0.0
    %379 = vmatprep.subr.mxu0 0.0
    %380 = vmatpush2.xpose.msra.mxu0 0.0
    %381 = vmatprep.subr.mxu0 0.0
    %382 = vmatpush2.xpose.msra.mxu0 0.0
    %383 = vmatprep.subr.mxu0 0.0
    %384 = vmatpush2.xpose.msra.mxu0 0.0
    %385 = vmatprep.subr.mxu0 0.0
    %386 = vmatpush2.xpose.msra.mxu0 0.0
    %387 = vmatprep.subr.mxu0 0.0
    %388 = vmatpush2.xpose.msra.mxu0 0.0
    %389 = vmatprep.subr.mxu0 0.0
    %390 = vmatpush2.xpose.msra.mxu0 0.0
    %391 = vmatprep.mubr.f32.mxu0 0.0
    %392 = vmatmul.mubr.f32.gmra.mxu0 %v323
    %v393 = vpop.f32.mrf.mxu0
    %v394 = vadd.f32 0.0, %v393
    %v395 = vpop.f32.mrf.mxu0
    %396 = vdwg.mxu0
    %v397 = vmul.f32 %v394, 0.17677669
    %v398 = vsel %vm151, %v397, -1e+30
    %v399 = vsel %vm155, %v398, -inf
    %400 = vmax.xlane.f32.xlu0 %v399
    %v401 = vpop.xlane.xlu0 %400
    %v402 = vsub.f32 %v398, %v401
    %v403 = vmul.f32 %v402, 1.442695
    %v404 = vpow.pop %v403
    %v405 = vsel %vm155, %v404, 0.0
    %406 = vadd.xlane.f32.xlu0 %v405
    %v407 = vpop.xlane.xlu0 %406
    %v408 = vrcp.pop %v407
    %v409 = vmul.f32 %v404, %v408
    %410 = vrot.lane.b32.xlu0 %v139, 56
    %v411 = vpop.permute.xlu0 %410
    %v414 = vsel %vm155, %v409, 0
    %416 = vmatprep.subr.mxu0 0.0
    %417 = vmatpush1.msra.mxu0 0.0
    %418 = vmatprep.subr.mxu0 0.0
    %419 = vmatpush1.msra.mxu0 0.0
    %420 = vmatprep.subr.mxu0 0.0
    %421 = vmatpush1.msra.mxu0 0.0
    %422 = vmatprep.subr.mxu0 0.0
    %423 = vmatpush1.msra.mxu0 0.0
    %424 = vmatprep.subr.mxu0 0.0
    %425 = vmatpush1.msra.mxu0 0.0
    %426 = vmatprep.subr.mxu0 0.0
    %427 = vmatpush1.msra.mxu0 0.0
    %428 = vmatprep.subr.mxu0 0.0
    %429 = vmatpush1.msra.mxu0 0.0
    %430 = vmatprep.subr.mxu0 0.0
    %431 = vmatpush1.msra.mxu0 0.0
    %432 = vmatprep.subr.mxu0 0.0
    %433 = vmatpush1.msra.mxu0 0.0
    %434 = vmatprep.subr.mxu0 0.0
    %435 = vmatpush1.msra.mxu0 0.0
    %436 = vmatprep.subr.mxu0 0.0
    %437 = vmatpush1.msra.mxu0 0.0
    %438 = vmatprep.subr.mxu0 0.0
    %439 = vmatpush1.msra.mxu0 0.0
    %440 = vmatprep.subr.mxu0 0.0
    %441 = vmatpush1.msra.mxu0 0.0
    %442 = vmatprep.subr.mxu0 0.0
    %443 = vmatpush1.msra.mxu0 0.0
    %444 = vmatprep.subr.mxu0 0.0
    %445 = vmatpush1.msra.mxu0 0.0
    %446 = vmatprep.subr.mxu0 0.0
    %447 = vmatpush1.msra.mxu0 %v411
    %448 = vmatprep.subr.mxu0 0.0
    %449 = vmatpush2.msra.mxu0 0.0
    %450 = vmatprep.subr.mxu0 0.0
    %451 = vmatpush2.msra.mxu0 0.0
    %452 = vmatprep.subr.mxu0 0.0
    %453 = vmatpush2.msra.mxu0 0.0
    %454 = vmatprep.subr.mxu0 0.0
    %455 = vmatpush2.msra.mxu0 0.0
    %456 = vmatprep.subr.mxu0 0.0
    %457 = vmatpush2.msra.mxu0 0.0
    %458 = vmatprep.subr.mxu0 0.0
    %459 = vmatpush2.msra.mxu0 0.0
    %460 = vmatprep.subr.mxu0 0.0
    %461 = vmatpush2.msra.mxu0 0.0
    %462 = vmatprep.subr.mxu0 0.0
    %463 = vmatpush2.msra.mxu0 0.0
    %464 = vmatprep.subr.mxu0 0.0
    %465 = vmatpush2.msra.mxu0 0.0
    %466 = vmatprep.subr.mxu0 0.0
    %467 = vmatpush2.msra.mxu0 0.0
    %468 = vmatprep.subr.mxu0 0.0
    %469 = vmatpush2.msra.mxu0 0.0
    %470 = vmatprep.subr.mxu0 0.0
    %471 = vmatpush2.msra.mxu0 0.0
    %472 = vmatprep.subr.mxu0 0.0
    %473 = vmatpush2.msra.mxu0 0.0
    %474 = vmatprep.subr.mxu0 0.0
    %475 = vmatpush2.msra.mxu0 0.0
    %476 = vmatprep.subr.mxu0 0.0
    %477 = vmatpush2.msra.mxu0 0.0
    %478 = vmatprep.subr.mxu0 0.0
    %479 = vmatpush2.msra.mxu0 0.0
    %480 = vmatprep.mubr.f32.mxu0 0.0
    %481 = vmatmul.mubr.f32.gmra.mxu0 %v414
    %v482 = vpop.f32.mrf.mxu0
    %v483 = vadd.f32 0.0, %v482
    %v484 = vpop.f32.mrf.mxu0
    %485 = vdwg.mxu0
    %486 = vrot.lane.b32.xlu0 %v139, 112
    %v487 = vpop.permute.xlu0 %486
    %488 = vrot.lane.b32.xlu0 %v139, 80
    %v489 = vpop.permute.xlu0 %488
    %v490 = vsel %vm155, %v487, 0
    %v492 = vsel %vm155, %v489, 0
    %494 = vmatprep.subr.mxu0 0.0
    %495 = vmatpush1.xpose.msra.mxu0 0.0
    %496 = vmatprep.subr.mxu0 0.0
    %497 = vmatpush1.xpose.msra.mxu0 0.0
    %498 = vmatprep.subr.mxu0 0.0
    %499 = vmatpush1.xpose.msra.mxu0 0.0
    %500 = vmatprep.subr.mxu0 0.0
    %501 = vmatpush1.xpose.msra.mxu0 0.0
    %502 = vmatprep.subr.mxu0 0.0
    %503 = vmatpush1.xpose.msra.mxu0 0.0
    %504 = vmatprep.subr.mxu0 0.0
    %505 = vmatpush1.xpose.msra.mxu0 0.0
    %506 = vmatprep.subr.mxu0 0.0
    %507 = vmatpush1.xpose.msra.mxu0 0.0
    %508 = vmatprep.subr.mxu0 0.0
    %509 = vmatpush1.xpose.msra.mxu0 0.0
    %510 = vmatprep.subr.mxu0 0.0
    %511 = vmatpush1.xpose.msra.mxu0 0.0
    %512 = vmatprep.subr.mxu0 0.0
    %513 = vmatpush1.xpose.msra.mxu0 0.0
    %514 = vmatprep.subr.mxu0 0.0
    %515 = vmatpush1.xpose.msra.mxu0 0.0
    %516 = vmatprep.subr.mxu0 0.0
    %517 = vmatpush1.xpose.msra.mxu0 0.0
    %518 = vmatprep.subr.mxu0 0.0
    %519 = vmatpush1.xpose.msra.mxu0 0.0
    %520 = vmatprep.subr.mxu0 0.0
    %521 = vmatpush1.xpose.msra.mxu0 0.0
    %522 = vmatprep.subr.mxu0 0.0
    %523 = vmatpush1.xpose.msra.mxu0 0.0
    %524 = vmatprep.subr.mxu0 0.0
    %525 = vmatpush1.xpose.msra.mxu0 %v492
    %526 = vmatprep.subr.mxu0 0.0
    %527 = vmatpush2.xpose.msra.mxu0 0.0
    %528 = vmatprep.subr.mxu0 0.0
    %529 = vmatpush2.xpose.msra.mxu0 0.0
    %530 = vmatprep.subr.mxu0 0.0
    %531 = vmatpush2.xpose.msra.mxu0 0.0
    %532 = vmatprep.subr.mxu0 0.0
    %533 = vmatpush2.xpose.msra.mxu0 0.0
    %534 = vmatprep.subr.mxu0 0.0
    %535 = vmatpush2.xpose.msra.mxu0 0.0
    %536 = vmatprep.subr.mxu0 0.0
    %537 = vmatpush2.xpose.msra.mxu0 0.0
    %538 = vmatprep.subr.mxu0 0.0
    %539 = vmatpush2.xpose.msra.mxu0 0.0
    %540 = vmatprep.subr.mxu0 0.0
    %541 = vmatpush2.xpose.msra.mxu0 0.0
    %542 = vmatprep.subr.mxu0 0.0
    %543 = vmatpush2.xpose.msra.mxu0 0.0
    %544 = vmatprep.subr.mxu0 0.0
    %545 = vmatpush2.xpose.msra.mxu0 0.0
    %546 = vmatprep.subr.mxu0 0.0
    %547 = vmatpush2.xpose.msra.mxu0 0.0
    %548 = vmatprep.subr.mxu0 0.0
    %549 = vmatpush2.xpose.msra.mxu0 0.0
    %550 = vmatprep.subr.mxu0 0.0
    %551 = vmatpush2.xpose.msra.mxu0 0.0
    %552 = vmatprep.subr.mxu0 0.0
    %553 = vmatpush2.xpose.msra.mxu0 0.0
    %554 = vmatprep.subr.mxu0 0.0
    %555 = vmatpush2.xpose.msra.mxu0 0.0
    %556 = vmatprep.subr.mxu0 0.0
    %557 = vmatpush2.xpose.msra.mxu0 0.0
    %558 = vmatprep.mubr.f32.mxu0 0.0
    %559 = vmatmul.mubr.f32.gmra.mxu0 %v490
    %v560 = vpop.f32.mrf.mxu0
    %v561 = vadd.f32 0.0, %v560
    %v562 = vpop.f32.mrf.mxu0
    %563 = vdwg.mxu0
    %v564 = vmul.f32 %v561, 0.17677669
    %v565 = vsel %vm151, %v564, -1e+30
    %v566 = vsel %vm155, %v565, -inf
    %567 = vmax.xlane.f32.xlu0 %v566
    %v568 = vpop.xlane.xlu0 %567
    %v569 = vsub.f32 %v565, %v568
    %v570 = vmul.f32 %v569, 1.442695
    %v571 = vpow.pop %v570
    %v572 = vsel %vm155, %v571, 0.0
    %573 = vadd.xlane.f32.xlu0 %v572
    %v574 = vpop.xlane.xlu0 %573
    %v575 = vrcp.pop %v574
    %v576 = vmul.f32 %v571, %v575
    %577 = vrot.lane.b32.xlu0 %v139, 48
    %v578 = vpop.permute.xlu0 %577
    %v581 = vsel %vm155, %v576, 0
    %583 = vmatprep.subr.mxu0 0.0
    %584 = vmatpush1.msra.mxu0 0.0
    %585 = vmatprep.subr.mxu0 0.0
    %586 = vmatpush1.msra.mxu0 0.0
    %587 = vmatprep.subr.mxu0 0.0
    %588 = vmatpush1.msra.mxu0 0.0
    %589 = vmatprep.subr.mxu0 0.0
    %590 = vmatpush1.msra.mxu0 0.0
    %591 = vmatprep.subr.mxu0 0.0
    %592 = vmatpush1.msra.mxu0 0.0
    %593 = vmatprep.subr.mxu0 0.0
    %594 = vmatpush1.msra.mxu0 0.0
    %595 = vmatprep.subr.mxu0 0.0
    %596 = vmatpush1.msra.mxu0 0.0
    %597 = vmatprep.subr.mxu0 0.0
    %598 = vmatpush1.msra.mxu0 0.0
    %599 = vmatprep.subr.mxu0 0.0
    %600 = vmatpush1.msra.mxu0 0.0
    %601 = vmatprep.subr.mxu0 0.0
    %602 = vmatpush1.msra.mxu0 0.0
    %603 = vmatprep.subr.mxu0 0.0
    %604 = vmatpush1.msra.mxu0 0.0
    %605 = vmatprep.subr.mxu0 0.0
    %606 = vmatpush1.msra.mxu0 0.0
    %607 = vmatprep.subr.mxu0 0.0
    %608 = vmatpush1.msra.mxu0 0.0
    %609 = vmatprep.subr.mxu0 0.0
    %610 = vmatpush1.msra.mxu0 0.0
    %611 = vmatprep.subr.mxu0 0.0
    %612 = vmatpush1.msra.mxu0 0.0
    %613 = vmatprep.subr.mxu0 0.0
    %614 = vmatpush1.msra.mxu0 %v578
    %615 = vmatprep.subr.mxu0 0.0
    %616 = vmatpush2.msra.mxu0 0.0
    %617 = vmatprep.subr.mxu0 0.0
    %618 = vmatpush2.msra.mxu0 0.0
    %619 = vmatprep.subr.mxu0 0.0
    %620 = vmatpush2.msra.mxu0 0.0
    %621 = vmatprep.subr.mxu0 0.0
    %622 = vmatpush2.msra.mxu0 0.0
    %623 = vmatprep.subr.mxu0 0.0
    %624 = vmatpush2.msra.mxu0 0.0
    %625 = vmatprep.subr.mxu0 0.0
    %626 = vmatpush2.msra.mxu0 0.0
    %627 = vmatprep.subr.mxu0 0.0
    %628 = vmatpush2.msra.mxu0 0.0
    %629 = vmatprep.subr.mxu0 0.0
    %630 = vmatpush2.msra.mxu0 0.0
    %631 = vmatprep.subr.mxu0 0.0
    %632 = vmatpush2.msra.mxu0 0.0
    %633 = vmatprep.subr.mxu0 0.0
    %634 = vmatpush2.msra.mxu0 0.0
    %635 = vmatprep.subr.mxu0 0.0
    %636 = vmatpush2.msra.mxu0 0.0
    %637 = vmatprep.subr.mxu0 0.0
    %638 = vmatpush2.msra.mxu0 0.0
    %639 = vmatprep.subr.mxu0 0.0
    %640 = vmatpush2.msra.mxu0 0.0
    %641 = vmatprep.subr.mxu0 0.0
    %642 = vmatpush2.msra.mxu0 0.0
    %643 = vmatprep.subr.mxu0 0.0
    %644 = vmatpush2.msra.mxu0 0.0
    %645 = vmatprep.subr.mxu0 0.0
    %646 = vmatpush2.msra.mxu0 0.0
    %647 = vmatprep.mubr.f32.mxu0 0.0
    %648 = vmatmul.mubr.f32.gmra.mxu0 %v581
    %v649 = vpop.f32.mrf.mxu0
    %v650 = vadd.f32 0.0, %v649
    %v651 = vpop.f32.mrf.mxu0
    %652 = vdwg.mxu0
    %653 = vrot.lane.b32.xlu0 %v139, 104
    %v654 = vpop.permute.xlu0 %653
    %655 = vrot.lane.b32.xlu0 %v139, 72
    %v656 = vpop.permute.xlu0 %655
    %v657 = vsel %vm155, %v654, 0
    %v659 = vsel %vm155, %v656, 0
    %661 = vmatprep.subr.mxu0 0.0
    %662 = vmatpush1.xpose.msra.mxu0 0.0
    %663 = vmatprep.subr.mxu0 0.0
    %664 = vmatpush1.xpose.msra.mxu0 0.0
    %665 = vmatprep.subr.mxu0 0.0
    %666 = vmatpush1.xpose.msra.mxu0 0.0
    %667 = vmatprep.subr.mxu0 0.0
    %668 = vmatpush1.xpose.msra.mxu0 0.0
    %669 = vmatprep.subr.mxu0 0.0
    %670 = vmatpush1.xpose.msra.mxu0 0.0
    %671 = vmatprep.subr.mxu0 0.0
    %672 = vmatpush1.xpose.msra.mxu0 0.0
    %673 = vmatprep.subr.mxu0 0.0
    %674 = vmatpush1.xpose.msra.mxu0 0.0
    %675 = vmatprep.subr.mxu0 0.0
    %676 = vmatpush1.xpose.msra.mxu0 0.0
    %677 = vmatprep.subr.mxu0 0.0
    %678 = vmatpush1.xpose.msra.mxu0 0.0
    %679 = vmatprep.subr.mxu0 0.0
    %680 = vmatpush1.xpose.msra.mxu0 0.0
    %681 = vmatprep.subr.mxu0 0.0
    %682 = vmatpush1.xpose.msra.mxu0 0.0
    %683 = vmatprep.subr.mxu0 0.0
    %684 = vmatpush1.xpose.msra.mxu0 0.0
    %685 = vmatprep.subr.mxu0 0.0
    %686 = vmatpush1.xpose.msra.mxu0 0.0
    %687 = vmatprep.subr.mxu0 0.0
    %688 = vmatpush1.xpose.msra.mxu0 0.0
    %689 = vmatprep.subr.mxu0 0.0
    %690 = vmatpush1.xpose.msra.mxu0 0.0
    %691 = vmatprep.subr.mxu0 0.0
    %692 = vmatpush1.xpose.msra.mxu0 %v659
    %693 = vmatprep.subr.mxu0 0.0
    %694 = vmatpush2.xpose.msra.mxu0 0.0
    %695 = vmatprep.subr.mxu0 0.0
    %696 = vmatpush2.xpose.msra.mxu0 0.0
    %697 = vmatprep.subr.mxu0 0.0
    %698 = vmatpush2.xpose.msra.mxu0 0.0
    %699 = vmatprep.subr.mxu0 0.0
    %700 = vmatpush2.xpose.msra.mxu0 0.0
    %701 = vmatprep.subr.mxu0 0.0
    %702 = vmatpush2.xpose.msra.mxu0 0.0
    %703 = vmatprep.subr.mxu0 0.0
    %704 = vmatpush2.xpose.msra.mxu0 0.0
    %705 = vmatprep.subr.mxu0 0.0
    %706 = vmatpush2.xpose.msra.mxu0 0.0
    %707 = vmatprep.subr.mxu0 0.0
    %708 = vmatpush2.xpose.msra.mxu0 0.0
    %709 = vmatprep.subr.mxu0 0.0
    %710 = vmatpush2.xpose.msra.mxu0 0.0
    %711 = vmatprep.subr.mxu0 0.0
    %712 = vmatpush2.xpose.msra.mxu0 0.0
    %713 = vmatprep.subr.mxu0 0.0
    %714 = vmatpush2.xpose.msra.mxu0 0.0
    %715 = vmatprep.subr.mxu0 0.0
    %716 = vmatpush2.xpose.msra.mxu0 0.0
    %717 = vmatprep.subr.mxu0 0.0
    %718 = vmatpush2.xpose.msra.mxu0 0.0
    %719 = vmatprep.subr.mxu0 0.0
    %720 = vmatpush2.xpose.msra.mxu0 0.0
    %721 = vmatprep.subr.mxu0 0.0
    %722 = vmatpush2.xpose.msra.mxu0 0.0
    %723 = vmatprep.subr.mxu0 0.0
    %724 = vmatpush2.xpose.msra.mxu0 0.0
    %725 = vmatprep.mubr.f32.mxu0 0.0
    %726 = vmatmul.mubr.f32.gmra.mxu0 %v657
    %v727 = vpop.f32.mrf.mxu0
    %v728 = vadd.f32 0.0, %v727
    %v729 = vpop.f32.mrf.mxu0
    %730 = vdwg.mxu0
    %v731 = vmul.f32 %v728, 0.17677669
    %v732 = vsel %vm151, %v731, -1e+30
    %v733 = vsel %vm155, %v732, -inf
    %734 = vmax.xlane.f32.xlu0 %v733
    %v735 = vpop.xlane.xlu0 %734
    %v736 = vsub.f32 %v732, %v735
    %v737 = vmul.f32 %v736, 1.442695
    %v738 = vpow.pop %v737
    %v739 = vsel %vm155, %v738, 0.0
    %740 = vadd.xlane.f32.xlu0 %v739
    %v741 = vpop.xlane.xlu0 %740
    %v742 = vrcp.pop %v741
    %v743 = vmul.f32 %v738, %v742
    %744 = vrot.lane.b32.xlu0 %v139, 40
    %v745 = vpop.permute.xlu0 %744
    %v748 = vsel %vm155, %v743, 0
    %750 = vmatprep.subr.mxu0 0.0
    %751 = vmatpush1.msra.mxu0 0.0
    %752 = vmatprep.subr.mxu0 0.0
    %753 = vmatpush1.msra.mxu0 0.0
    %754 = vmatprep.subr.mxu0 0.0
    %755 = vmatpush1.msra.mxu0 0.0
    %756 = vmatprep.subr.mxu0 0.0
    %757 = vmatpush1.msra.mxu0 0.0
    %758 = vmatprep.subr.mxu0 0.0
    %759 = vmatpush1.msra.mxu0 0.0
    %760 = vmatprep.subr.mxu0 0.0
    %761 = vmatpush1.msra.mxu0 0.0
    %762 = vmatprep.subr.mxu0 0.0
    %763 = vmatpush1.msra.mxu0 0.0
    %764 = vmatprep.subr.mxu0 0.0
    %765 = vmatpush1.msra.mxu0 0.0
    %766 = vmatprep.subr.mxu0 0.0
    %767 = vmatpush1.msra.mxu0 0.0
    %768 = vmatprep.subr.mxu0 0.0
    %769 = vmatpush1.msra.mxu0 0.0
    %770 = vmatprep.subr.mxu0 0.0
    %771 = vmatpush1.msra.mxu0 0.0
    %772 = vmatprep.subr.mxu0 0.0
    %773 = vmatpush1.msra.mxu0 0.0
    %774 = vmatprep.subr.mxu0 0.0
    %775 = vmatpush1.msra.mxu0 0.0
    %776 = vmatprep.subr.mxu0 0.0
    %777 = vmatpush1.msra.mxu0 0.0
    %778 = vmatprep.subr.mxu0 0.0
    %779 = vmatpush1.msra.mxu0 0.0
    %780 = vmatprep.subr.mxu0 0.0
    %781 = vmatpush1.msra.mxu0 %v745
    %782 = vmatprep.subr.mxu0 0.0
    %783 = vmatpush2.msra.mxu0 0.0
    %784 = vmatprep.subr.mxu0 0.0
    %785 = vmatpush2.msra.mxu0 0.0
    %786 = vmatprep.subr.mxu0 0.0
    %787 = vmatpush2.msra.mxu0 0.0
    %788 = vmatprep.subr.mxu0 0.0
    %789 = vmatpush2.msra.mxu0 0.0
    %790 = vmatprep.subr.mxu0 0.0
    %791 = vmatpush2.msra.mxu0 0.0
    %792 = vmatprep.subr.mxu0 0.0
    %793 = vmatpush2.msra.mxu0 0.0
    %794 = vmatprep.subr.mxu0 0.0
    %795 = vmatpush2.msra.mxu0 0.0
    %796 = vmatprep.subr.mxu0 0.0
    %797 = vmatpush2.msra.mxu0 0.0
    %798 = vmatprep.subr.mxu0 0.0
    %799 = vmatpush2.msra.mxu0 0.0
    %800 = vmatprep.subr.mxu0 0.0
    %801 = vmatpush2.msra.mxu0 0.0
    %802 = vmatprep.subr.mxu0 0.0
    %803 = vmatpush2.msra.mxu0 0.0
    %804 = vmatprep.subr.mxu0 0.0
    %805 = vmatpush2.msra.mxu0 0.0
    %806 = vmatprep.subr.mxu0 0.0
    %807 = vmatpush2.msra.mxu0 0.0
    %808 = vmatprep.subr.mxu0 0.0
    %809 = vmatpush2.msra.mxu0 0.0
    %810 = vmatprep.subr.mxu0 0.0
    %811 = vmatpush2.msra.mxu0 0.0
    %812 = vmatprep.subr.mxu0 0.0
    %813 = vmatpush2.msra.mxu0 0.0
    %814 = vmatprep.mubr.f32.mxu0 0.0
    %815 = vmatmul.mubr.f32.gmra.mxu0 %v748
    %v816 = vpop.f32.mrf.mxu0
    %v817 = vadd.f32 0.0, %v816
    %v818 = vpop.f32.mrf.mxu0
    %819 = vdwg.mxu0
    %821 = vrot.lane.b32.xlu0 %v483, 8
    %v822 = vpop.permute.xlu0 %821
    %825 = vrot.lane.b32.xlu0 %v650, 16
    %v826 = vpop.permute.xlu0 %825
    %829 = vrot.lane.b32.xlu0 %v817, 24
    %v830 = vpop.permute.xlu0 %829
    %v832 = vsel %vm155, %v316, %v822
    %vm833 = vcmask 130048
    %v834 = vsel %vm833, %v832, %v826
    %vm835 = vcmask 195584
    %v836 = vsel %vm835, %v834, %v830
    %838 = vrot.lane.b32.xlu0 %v144, 96
    %v839 = vpop.permute.xlu0 %838
    %v840 = vsel %vm155, %v144, 0
    %v842 = vsel %vm155, %v839, 0
    %844 = vmatprep.subr.mxu0 0.0
    %845 = vmatpush1.xpose.msra.mxu0 0.0
    %846 = vmatprep.subr.mxu0 0.0
    %847 = vmatpush1.xpose.msra.mxu0 0.0
    %848 = vmatprep.subr.mxu0 0.0
    %849 = vmatpush1.xpose.msra.mxu0 0.0
    %850 = vmatprep.subr.mxu0 0.0
    %851 = vmatpush1.xpose.msra.mxu0 0.0
    %852 = vmatprep.subr.mxu0 0.0
    %853 = vmatpush1.xpose.msra.mxu0 0.0
    %854 = vmatprep.subr.mxu0 0.0
    %855 = vmatpush1.xpose.msra.mxu0 0.0
    %856 = vmatprep.subr.mxu0 0.0
    %857 = vmatpush1.xpose.msra.mxu0 0.0
    %858 = vmatprep.subr.mxu0 0.0
    %859 = vmatpush1.xpose.msra.mxu0 0.0
    %860 = vmatprep.subr.mxu0 0.0
    %861 = vmatpush1.xpose.msra.mxu0 0.0
    %862 = vmatprep.subr.mxu0 0.0
    %863 = vmatpush1.xpose.msra.mxu0 0.0
    %864 = vmatprep.subr.mxu0 0.0
    %865 = vmatpush1.xpose.msra.mxu0 0.0
    %866 = vmatprep.subr.mxu0 0.0
    %867 = vmatpush1.xpose.msra.mxu0 0.0
    %868 = vmatprep.subr.mxu0 0.0
    %869 = vmatpush1.xpose.msra.mxu0 0.0
    %870 = vmatprep.subr.mxu0 0.0
    %871 = vmatpush1.xpose.msra.mxu0 0.0
    %872 = vmatprep.subr.mxu0 0.0
    %873 = vmatpush1.xpose.msra.mxu0 0.0
    %874 = vmatprep.subr.mxu0 0.0
    %875 = vmatpush1.xpose.msra.mxu0 %v842
    %876 = vmatprep.subr.mxu0 0.0
    %877 = vmatpush2.xpose.msra.mxu0 0.0
    %878 = vmatprep.subr.mxu0 0.0
    %879 = vmatpush2.xpose.msra.mxu0 0.0
    %880 = vmatprep.subr.mxu0 0.0
    %881 = vmatpush2.xpose.msra.mxu0 0.0
    %882 = vmatprep.subr.mxu0 0.0
    %883 = vmatpush2.xpose.msra.mxu0 0.0
    %884 = vmatprep.subr.mxu0 0.0
    %885 = vmatpush2.xpose.msra.mxu0 0.0
    %886 = vmatprep.subr.mxu0 0.0
    %887 = vmatpush2.xpose.msra.mxu0 0.0
    %888 = vmatprep.subr.mxu0 0.0
    %889 = vmatpush2.xpose.msra.mxu0 0.0
    %890 = vmatprep.subr.mxu0 0.0
    %891 = vmatpush2.xpose.msra.mxu0 0.0
    %892 = vmatprep.subr.mxu0 0.0
    %893 = vmatpush2.xpose.msra.mxu0 0.0
    %894 = vmatprep.subr.mxu0 0.0
    %895 = vmatpush2.xpose.msra.mxu0 0.0
    %896 = vmatprep.subr.mxu0 0.0
    %897 = vmatpush2.xpose.msra.mxu0 0.0
    %898 = vmatprep.subr.mxu0 0.0
    %899 = vmatpush2.xpose.msra.mxu0 0.0
    %900 = vmatprep.subr.mxu0 0.0
    %901 = vmatpush2.xpose.msra.mxu0 0.0
    %902 = vmatprep.subr.mxu0 0.0
    %903 = vmatpush2.xpose.msra.mxu0 0.0
    %904 = vmatprep.subr.mxu0 0.0
    %905 = vmatpush2.xpose.msra.mxu0 0.0
    %906 = vmatprep.subr.mxu0 0.0
    %907 = vmatpush2.xpose.msra.mxu0 0.0
    %908 = vmatprep.mubr.f32.mxu0 0.0
    %909 = vmatmul.mubr.f32.gmra.mxu0 %v840
    %v910 = vpop.f32.mrf.mxu0
    %v911 = vadd.f32 0.0, %v910
    %v912 = vpop.f32.mrf.mxu0
    %913 = vdwg.mxu0
    %v914 = vmul.f32 %v911, 0.17677669
    %v915 = vsel %vm151, %v914, -1e+30
    %v916 = vsel %vm155, %v915, -inf
    %917 = vmax.xlane.f32.xlu0 %v916
    %v918 = vpop.xlane.xlu0 %917
    %v919 = vsub.f32 %v915, %v918
    %v920 = vmul.f32 %v919, 1.442695
    %v921 = vpow.pop %v920
    %v922 = vsel %vm155, %v921, 0.0
    %923 = vadd.xlane.f32.xlu0 %v922
    %v924 = vpop.xlane.xlu0 %923
    %v925 = vrcp.pop %v924
    %v926 = vmul.f32 %v921, %v925
    %927 = vrot.lane.b32.xlu0 %v144, 64
    %v928 = vpop.permute.xlu0 %927
    %v931 = vsel %vm155, %v926, 0
    %933 = vmatprep.subr.mxu0 0.0
    %934 = vmatpush1.msra.mxu0 0.0
    %935 = vmatprep.subr.mxu0 0.0
    %936 = vmatpush1.msra.mxu0 0.0
    %937 = vmatprep.subr.mxu0 0.0
    %938 = vmatpush1.msra.mxu0 0.0
    %939 = vmatprep.subr.mxu0 0.0
    %940 = vmatpush1.msra.mxu0 0.0
    %941 = vmatprep.subr.mxu0 0.0
    %942 = vmatpush1.msra.mxu0 0.0
    %943 = vmatprep.subr.mxu0 0.0
    %944 = vmatpush1.msra.mxu0 0.0
    %945 = vmatprep.subr.mxu0 0.0
    %946 = vmatpush1.msra.mxu0 0.0
    %947 = vmatprep.subr.mxu0 0.0
    %948 = vmatpush1.msra.mxu0 0.0
    %949 = vmatprep.subr.mxu0 0.0
    %950 = vmatpush1.msra.mxu0 0.0
    %951 = vmatprep.subr.mxu0 0.0
    %952 = vmatpush1.msra.mxu0 0.0
    %953 = vmatprep.subr.mxu0 0.0
    %954 = vmatpush1.msra.mxu0 0.0
    %955 = vmatprep.subr.mxu0 0.0
    %956 = vmatpush1.msra.mxu0 0.0
    %957 = vmatprep.subr.mxu0 0.0
    %958 = vmatpush1.msra.mxu0 0.0
    %959 = vmatprep.subr.mxu0 0.0
    %960 = vmatpush1.msra.mxu0 0.0
    %961 = vmatprep.subr.mxu0 0.0
    %962 = vmatpush1.msra.mxu0 0.0
    %963 = vmatprep.subr.mxu0 0.0
    %964 = vmatpush1.msra.mxu0 %v928
    %965 = vmatprep.subr.mxu0 0.0
    %966 = vmatpush2.msra.mxu0 0.0
    %967 = vmatprep.subr.mxu0 0.0
    %968 = vmatpush2.msra.mxu0 0.0
    %969 = vmatprep.subr.mxu0 0.0
    %970 = vmatpush2.msra.mxu0 0.0
    %971 = vmatprep.subr.mxu0 0.0
    %972 = vmatpush2.msra.mxu0 0.0
    %973 = vmatprep.subr.mxu0 0.0
    %974 = vmatpush2.msra.mxu0 0.0
    %975 = vmatprep.subr.mxu0 0.0
    %976 = vmatpush2.msra.mxu0 0.0
    %977 = vmatprep.subr.mxu0 0.0
    %978 = vmatpush2.msra.mxu0 0.0
    %979 = vmatprep.subr.mxu0 0.0
    %980 = vmatpush2.msra.mxu0 0.0
    %981 = vmatprep.subr.mxu0 0.0
    %982 = vmatpush2.msra.mxu0 0.0
    %983 = vmatprep.subr.mxu0 0.0
    %984 = vmatpush2.msra.mxu0 0.0
    %985 = vmatprep.subr.mxu0 0.0
    %986 = vmatpush2.msra.mxu0 0.0
    %987 = vmatprep.subr.mxu0 0.0
    %988 = vmatpush2.msra.mxu0 0.0
    %989 = vmatprep.subr.mxu0 0.0
    %990 = vmatpush2.msra.mxu0 0.0
    %991 = vmatprep.subr.mxu0 0.0
    %992 = vmatpush2.msra.mxu0 0.0
    %993 = vmatprep.subr.mxu0 0.0
    %994 = vmatpush2.msra.mxu0 0.0
    %995 = vmatprep.subr.mxu0 0.0
    %996 = vmatpush2.msra.mxu0 0.0
    %997 = vmatprep.mubr.f32.mxu0 0.0
    %998 = vmatmul.mubr.f32.gmra.mxu0 %v931
    %v999 = vpop.f32.mrf.mxu0
    %v1000 = vadd.f32 0.0, %v999
    %v1001 = vpop.f32.mrf.mxu0
    %1002 = vdwg.mxu0
    %1003 = vrot.lane.b32.xlu0 %v144, 120
    %v1004 = vpop.permute.xlu0 %1003
    %1005 = vrot.lane.b32.xlu0 %v144, 88
    %v1006 = vpop.permute.xlu0 %1005
    %v1007 = vsel %vm155, %v1004, 0
    %v1009 = vsel %vm155, %v1006, 0
    %1011 = vmatprep.subr.mxu0 0.0
    %1012 = vmatpush1.xpose.msra.mxu0 0.0
    %1013 = vmatprep.subr.mxu0 0.0
    %1014 = vmatpush1.xpose.msra.mxu0 0.0
    %1015 = vmatprep.subr.mxu0 0.0
    %1016 = vmatpush1.xpose.msra.mxu0 0.0
    %1017 = vmatprep.subr.mxu0 0.0
    %1018 = vmatpush1.xpose.msra.mxu0 0.0
    %1019 = vmatprep.subr.mxu0 0.0
    %1020 = vmatpush1.xpose.msra.mxu0 0.0
    %1021 = vmatprep.subr.mxu0 0.0
    %1022 = vmatpush1.xpose.msra.mxu0 0.0
    %1023 = vmatprep.subr.mxu0 0.0
    %1024 = vmatpush1.xpose.msra.mxu0 0.0
    %1025 = vmatprep.subr.mxu0 0.0
    %1026 = vmatpush1.xpose.msra.mxu0 0.0
    %1027 = vmatprep.subr.mxu0 0.0
    %1028 = vmatpush1.xpose.msra.mxu0 0.0
    %1029 = vmatprep.subr.mxu0 0.0
    %1030 = vmatpush1.xpose.msra.mxu0 0.0
    %1031 = vmatprep.subr.mxu0 0.0
    %1032 = vmatpush1.xpose.msra.mxu0 0.0
    %1033 = vmatprep.subr.mxu0 0.0
    %1034 = vmatpush1.xpose.msra.mxu0 0.0
    %1035 = vmatprep.subr.mxu0 0.0
    %1036 = vmatpush1.xpose.msra.mxu0 0.0
    %1037 = vmatprep.subr.mxu0 0.0
    %1038 = vmatpush1.xpose.msra.mxu0 0.0
    %1039 = vmatprep.subr.mxu0 0.0
    %1040 = vmatpush1.xpose.msra.mxu0 0.0
    %1041 = vmatprep.subr.mxu0 0.0
    %1042 = vmatpush1.xpose.msra.mxu0 %v1009
    %1043 = vmatprep.subr.mxu0 0.0
    %1044 = vmatpush2.xpose.msra.mxu0 0.0
    %1045 = vmatprep.subr.mxu0 0.0
    %1046 = vmatpush2.xpose.msra.mxu0 0.0
    %1047 = vmatprep.subr.mxu0 0.0
    %1048 = vmatpush2.xpose.msra.mxu0 0.0
    %1049 = vmatprep.subr.mxu0 0.0
    %1050 = vmatpush2.xpose.msra.mxu0 0.0
    %1051 = vmatprep.subr.mxu0 0.0
    %1052 = vmatpush2.xpose.msra.mxu0 0.0
    %1053 = vmatprep.subr.mxu0 0.0
    %1054 = vmatpush2.xpose.msra.mxu0 0.0
    %1055 = vmatprep.subr.mxu0 0.0
    %1056 = vmatpush2.xpose.msra.mxu0 0.0
    %1057 = vmatprep.subr.mxu0 0.0
    %1058 = vmatpush2.xpose.msra.mxu0 0.0
    %1059 = vmatprep.subr.mxu0 0.0
    %1060 = vmatpush2.xpose.msra.mxu0 0.0
    %1061 = vmatprep.subr.mxu0 0.0
    %1062 = vmatpush2.xpose.msra.mxu0 0.0
    %1063 = vmatprep.subr.mxu0 0.0
    %1064 = vmatpush2.xpose.msra.mxu0 0.0
    %1065 = vmatprep.subr.mxu0 0.0
    %1066 = vmatpush2.xpose.msra.mxu0 0.0
    %1067 = vmatprep.subr.mxu0 0.0
    %1068 = vmatpush2.xpose.msra.mxu0 0.0
    %1069 = vmatprep.subr.mxu0 0.0
    %1070 = vmatpush2.xpose.msra.mxu0 0.0
    %1071 = vmatprep.subr.mxu0 0.0
    %1072 = vmatpush2.xpose.msra.mxu0 0.0
    %1073 = vmatprep.subr.mxu0 0.0
    %1074 = vmatpush2.xpose.msra.mxu0 0.0
    %1075 = vmatprep.mubr.f32.mxu0 0.0
    %1076 = vmatmul.mubr.f32.gmra.mxu0 %v1007
    %v1077 = vpop.f32.mrf.mxu0
    %v1078 = vadd.f32 0.0, %v1077
    %v1079 = vpop.f32.mrf.mxu0
    %1080 = vdwg.mxu0
    %v1081 = vmul.f32 %v1078, 0.17677669
    %v1082 = vsel %vm151, %v1081, -1e+30
    %v1083 = vsel %vm155, %v1082, -inf
    %1084 = vmax.xlane.f32.xlu0 %v1083
    %v1085 = vpop.xlane.xlu0 %1084
    %v1086 = vsub.f32 %v1082, %v1085
    %v1087 = vmul.f32 %v1086, 1.442695
    %v1088 = vpow.pop %v1087
    %v1089 = vsel %vm155, %v1088, 0.0
    %1090 = vadd.xlane.f32.xlu0 %v1089
    %v1091 = vpop.xlane.xlu0 %1090
    %v1092 = vrcp.pop %v1091
    %v1093 = vmul.f32 %v1088, %v1092
    %1094 = vrot.lane.b32.xlu0 %v144, 56
    %v1095 = vpop.permute.xlu0 %1094
    %v1098 = vsel %vm155, %v1093, 0
    %1100 = vmatprep.subr.mxu0 0.0
    %1101 = vmatpush1.msra.mxu0 0.0
    %1102 = vmatprep.subr.mxu0 0.0
    %1103 = vmatpush1.msra.mxu0 0.0
    %1104 = vmatprep.subr.mxu0 0.0
    %1105 = vmatpush1.msra.mxu0 0.0
    %1106 = vmatprep.subr.mxu0 0.0
    %1107 = vmatpush1.msra.mxu0 0.0
    %1108 = vmatprep.subr.mxu0 0.0
    %1109 = vmatpush1.msra.mxu0 0.0
    %1110 = vmatprep.subr.mxu0 0.0
    %1111 = vmatpush1.msra.mxu0 0.0
    %1112 = vmatprep.subr.mxu0 0.0
    %1113 = vmatpush1.msra.mxu0 0.0
    %1114 = vmatprep.subr.mxu0 0.0
    %1115 = vmatpush1.msra.mxu0 0.0
    %1116 = vmatprep.subr.mxu0 0.0
    %1117 = vmatpush1.msra.mxu0 0.0
    %1118 = vmatprep.subr.mxu0 0.0
    %1119 = vmatpush1.msra.mxu0 0.0
    %1120 = vmatprep.subr.mxu0 0.0
    %1121 = vmatpush1.msra.mxu0 0.0
    %1122 = vmatprep.subr.mxu0 0.0
    %1123 = vmatpush1.msra.mxu0 0.0
    %1124 = vmatprep.subr.mxu0 0.0
    %1125 = vmatpush1.msra.mxu0 0.0
    %1126 = vmatprep.subr.mxu0 0.0
    %1127 = vmatpush1.msra.mxu0 0.0
    %1128 = vmatprep.subr.mxu0 0.0
    %1129 = vmatpush1.msra.mxu0 0.0
    %1130 = vmatprep.subr.mxu0 0.0
    %1131 = vmatpush1.msra.mxu0 %v1095
    %1132 = vmatprep.subr.mxu0 0.0
    %1133 = vmatpush2.msra.mxu0 0.0
    %1134 = vmatprep.subr.mxu0 0.0
    %1135 = vmatpush2.msra.mxu0 0.0
    %1136 = vmatprep.subr.mxu0 0.0
    %1137 = vmatpush2.msra.mxu0 0.0
    %1138 = vmatprep.subr.mxu0 0.0
    %1139 = vmatpush2.msra.mxu0 0.0
    %1140 = vmatprep.subr.mxu0 0.0
    %1141 = vmatpush2.msra.mxu0 0.0
    %1142 = vmatprep.subr.mxu0 0.0
    %1143 = vmatpush2.msra.mxu0 0.0
    %1144 = vmatprep.subr.mxu0 0.0
    %1145 = vmatpush2.msra.mxu0 0.0
    %1146 = vmatprep.subr.mxu0 0.0
    %1147 = vmatpush2.msra.mxu0 0.0
    %1148 = vmatprep.subr.mxu0 0.0
    %1149 = vmatpush2.msra.mxu0 0.0
    %1150 = vmatprep.subr.mxu0 0.0
    %1151 = vmatpush2.msra.mxu0 0.0
    %1152 = vmatprep.subr.mxu0 0.0
    %1153 = vmatpush2.msra.mxu0 0.0
    %1154 = vmatprep.subr.mxu0 0.0
    %1155 = vmatpush2.msra.mxu0 0.0
    %1156 = vmatprep.subr.mxu0 0.0
    %1157 = vmatpush2.msra.mxu0 0.0
    %1158 = vmatprep.subr.mxu0 0.0
    %1159 = vmatpush2.msra.mxu0 0.0
    %1160 = vmatprep.subr.mxu0 0.0
    %1161 = vmatpush2.msra.mxu0 0.0
    %1162 = vmatprep.subr.mxu0 0.0
    %1163 = vmatpush2.msra.mxu0 0.0
    %1164 = vmatprep.mubr.f32.mxu0 0.0
    %1165 = vmatmul.mubr.f32.gmra.mxu0 %v1098
    %v1166 = vpop.f32.mrf.mxu0
    %v1167 = vadd.f32 0.0, %v1166
    %v1168 = vpop.f32.mrf.mxu0
    %1169 = vdwg.mxu0
    %1170 = vrot.lane.b32.xlu0 %v144, 112
    %v1171 = vpop.permute.xlu0 %1170
    %1172 = vrot.lane.b32.xlu0 %v144, 80
    %v1173 = vpop.permute.xlu0 %1172
    %v1174 = vsel %vm155, %v1171, 0
    %v1176 = vsel %vm155, %v1173, 0
    %1178 = vmatprep.subr.mxu0 0.0
    %1179 = vmatpush1.xpose.msra.mxu0 0.0
    %1180 = vmatprep.subr.mxu0 0.0
    %1181 = vmatpush1.xpose.msra.mxu0 0.0
    %1182 = vmatprep.subr.mxu0 0.0
    %1183 = vmatpush1.xpose.msra.mxu0 0.0
    %1184 = vmatprep.subr.mxu0 0.0
    %1185 = vmatpush1.xpose.msra.mxu0 0.0
    %1186 = vmatprep.subr.mxu0 0.0
    %1187 = vmatpush1.xpose.msra.mxu0 0.0
    %1188 = vmatprep.subr.mxu0 0.0
    %1189 = vmatpush1.xpose.msra.mxu0 0.0
    %1190 = vmatprep.subr.mxu0 0.0
    %1191 = vmatpush1.xpose.msra.mxu0 0.0
    %1192 = vmatprep.subr.mxu0 0.0
    %1193 = vmatpush1.xpose.msra.mxu0 0.0
    %1194 = vmatprep.subr.mxu0 0.0
    %1195 = vmatpush1.xpose.msra.mxu0 0.0
    %1196 = vmatprep.subr.mxu0 0.0
    %1197 = vmatpush1.xpose.msra.mxu0 0.0
    %1198 = vmatprep.subr.mxu0 0.0
    %1199 = vmatpush1.xpose.msra.mxu0 0.0
    %1200 = vmatprep.subr.mxu0 0.0
    %1201 = vmatpush1.xpose.msra.mxu0 0.0
    %1202 = vmatprep.subr.mxu0 0.0
    %1203 = vmatpush1.xpose.msra.mxu0 0.0
    %1204 = vmatprep.subr.mxu0 0.0
    %1205 = vmatpush1.xpose.msra.mxu0 0.0
    %1206 = vmatprep.subr.mxu0 0.0
    %1207 = vmatpush1.xpose.msra.mxu0 0.0
    %1208 = vmatprep.subr.mxu0 0.0
    %1209 = vmatpush1.xpose.msra.mxu0 %v1176
    %1210 = vmatprep.subr.mxu0 0.0
    %1211 = vmatpush2.xpose.msra.mxu0 0.0
    %1212 = vmatprep.subr.mxu0 0.0
    %1213 = vmatpush2.xpose.msra.mxu0 0.0
    %1214 = vmatprep.subr.mxu0 0.0
    %1215 = vmatpush2.xpose.msra.mxu0 0.0
    %1216 = vmatprep.subr.mxu0 0.0
    %1217 = vmatpush2.xpose.msra.mxu0 0.0
    %1218 = vmatprep.subr.mxu0 0.0
    %1219 = vmatpush2.xpose.msra.mxu0 0.0
    %1220 = vmatprep.subr.mxu0 0.0
    %1221 = vmatpush2.xpose.msra.mxu0 0.0
    %1222 = vmatprep.subr.mxu0 0.0
    %1223 = vmatpush2.xpose.msra.mxu0 0.0
    %1224 = vmatprep.subr.mxu0 0.0
    %1225 = vmatpush2.xpose.msra.mxu0 0.0
    %1226 = vmatprep.subr.mxu0 0.0
    %1227 = vmatpush2.xpose.msra.mxu0 0.0
    %1228 = vmatprep.subr.mxu0 0.0
    %1229 = vmatpush2.xpose.msra.mxu0 0.0
    %1230 = vmatprep.subr.mxu0 0.0
    %1231 = vmatpush2.xpose.msra.mxu0 0.0
    %1232 = vmatprep.subr.mxu0 0.0
    %1233 = vmatpush2.xpose.msra.mxu0 0.0
    %1234 = vmatprep.subr.mxu0 0.0
    %1235 = vmatpush2.xpose.msra.mxu0 0.0
    %1236 = vmatprep.subr.mxu0 0.0
    %1237 = vmatpush2.xpose.msra.mxu0 0.0
    %1238 = vmatprep.subr.mxu0 0.0
    %1239 = vmatpush2.xpose.msra.mxu0 0.0
    %1240 = vmatprep.subr.mxu0 0.0
    %1241 = vmatpush2.xpose.msra.mxu0 0.0
    %1242 = vmatprep.mubr.f32.mxu0 0.0
    %1243 = vmatmul.mubr.f32.gmra.mxu0 %v1174
    %v1244 = vpop.f32.mrf.mxu0
    %v1245 = vadd.f32 0.0, %v1244
    %v1246 = vpop.f32.mrf.mxu0
    %1247 = vdwg.mxu0
    %v1248 = vmul.f32 %v1245, 0.17677669
    %v1249 = vsel %vm151, %v1248, -1e+30
    %v1250 = vsel %vm155, %v1249, -inf
    %1251 = vmax.xlane.f32.xlu0 %v1250
    %v1252 = vpop.xlane.xlu0 %1251
    %v1253 = vsub.f32 %v1249, %v1252
    %v1254 = vmul.f32 %v1253, 1.442695
    %v1255 = vpow.pop %v1254
    %v1256 = vsel %vm155, %v1255, 0.0
    %1257 = vadd.xlane.f32.xlu0 %v1256
    %v1258 = vpop.xlane.xlu0 %1257
    %v1259 = vrcp.pop %v1258
    %v1260 = vmul.f32 %v1255, %v1259
    %1261 = vrot.lane.b32.xlu0 %v144, 48
    %v1262 = vpop.permute.xlu0 %1261
    %v1265 = vsel %vm155, %v1260, 0
    %1267 = vmatprep.subr.mxu0 0.0
    %1268 = vmatpush1.msra.mxu0 0.0
    %1269 = vmatprep.subr.mxu0 0.0
    %1270 = vmatpush1.msra.mxu0 0.0
    %1271 = vmatprep.subr.mxu0 0.0
    %1272 = vmatpush1.msra.mxu0 0.0
    %1273 = vmatprep.subr.mxu0 0.0
    %1274 = vmatpush1.msra.mxu0 0.0
    %1275 = vmatprep.subr.mxu0 0.0
    %1276 = vmatpush1.msra.mxu0 0.0
    %1277 = vmatprep.subr.mxu0 0.0
    %1278 = vmatpush1.msra.mxu0 0.0
    %1279 = vmatprep.subr.mxu0 0.0
    %1280 = vmatpush1.msra.mxu0 0.0
    %1281 = vmatprep.subr.mxu0 0.0
    %1282 = vmatpush1.msra.mxu0 0.0
    %1283 = vmatprep.subr.mxu0 0.0
    %1284 = vmatpush1.msra.mxu0 0.0
    %1285 = vmatprep.subr.mxu0 0.0
    %1286 = vmatpush1.msra.mxu0 0.0
    %1287 = vmatprep.subr.mxu0 0.0
    %1288 = vmatpush1.msra.mxu0 0.0
    %1289 = vmatprep.subr.mxu0 0.0
    %1290 = vmatpush1.msra.mxu0 0.0
    %1291 = vmatprep.subr.mxu0 0.0
    %1292 = vmatpush1.msra.mxu0 0.0
    %1293 = vmatprep.subr.mxu0 0.0
    %1294 = vmatpush1.msra.mxu0 0.0
    %1295 = vmatprep.subr.mxu0 0.0
    %1296 = vmatpush1.msra.mxu0 0.0
    %1297 = vmatprep.subr.mxu0 0.0
    %1298 = vmatpush1.msra.mxu0 %v1262
    %1299 = vmatprep.subr.mxu0 0.0
    %1300 = vmatpush2.msra.mxu0 0.0
    %1301 = vmatprep.subr.mxu0 0.0
    %1302 = vmatpush2.msra.mxu0 0.0
    %1303 = vmatprep.subr.mxu0 0.0
    %1304 = vmatpush2.msra.mxu0 0.0
    %1305 = vmatprep.subr.mxu0 0.0
    %1306 = vmatpush2.msra.mxu0 0.0
    %1307 = vmatprep.subr.mxu0 0.0
    %1308 = vmatpush2.msra.mxu0 0.0
    %1309 = vmatprep.subr.mxu0 0.0
    %1310 = vmatpush2.msra.mxu0 0.0
    %1311 = vmatprep.subr.mxu0 0.0
    %1312 = vmatpush2.msra.mxu0 0.0
    %1313 = vmatprep.subr.mxu0 0.0
    %1314 = vmatpush2.msra.mxu0 0.0
    %1315 = vmatprep.subr.mxu0 0.0
    %1316 = vmatpush2.msra.mxu0 0.0
    %1317 = vmatprep.subr.mxu0 0.0
    %1318 = vmatpush2.msra.mxu0 0.0
    %1319 = vmatprep.subr.mxu0 0.0
    %1320 = vmatpush2.msra.mxu0 0.0
    %1321 = vmatprep.subr.mxu0 0.0
    %1322 = vmatpush2.msra.mxu0 0.0
    %1323 = vmatprep.subr.mxu0 0.0
    %1324 = vmatpush2.msra.mxu0 0.0
    %1325 = vmatprep.subr.mxu0 0.0
    %1326 = vmatpush2.msra.mxu0 0.0
    %1327 = vmatprep.subr.mxu0 0.0
    %1328 = vmatpush2.msra.mxu0 0.0
    %1329 = vmatprep.subr.mxu0 0.0
    %1330 = vmatpush2.msra.mxu0 0.0
    %1331 = vmatprep.mubr.f32.mxu0 0.0
    %1332 = vmatmul.mubr.f32.gmra.mxu0 %v1265
    %v1333 = vpop.f32.mrf.mxu0
    %v1334 = vadd.f32 0.0, %v1333
    %v1335 = vpop.f32.mrf.mxu0
    %1336 = vdwg.mxu0
    %1337 = vrot.lane.b32.xlu0 %v144, 104
    %v1338 = vpop.permute.xlu0 %1337
    %1339 = vrot.lane.b32.xlu0 %v144, 72
    %v1340 = vpop.permute.xlu0 %1339
    %v1341 = vsel %vm155, %v1338, 0
    %v1343 = vsel %vm155, %v1340, 0
    %1345 = vmatprep.subr.mxu0 0.0
    %1346 = vmatpush1.xpose.msra.mxu0 0.0
    %1347 = vmatprep.subr.mxu0 0.0
    %1348 = vmatpush1.xpose.msra.mxu0 0.0
    %1349 = vmatprep.subr.mxu0 0.0
    %1350 = vmatpush1.xpose.msra.mxu0 0.0
    %1351 = vmatprep.subr.mxu0 0.0
    %1352 = vmatpush1.xpose.msra.mxu0 0.0
    %1353 = vmatprep.subr.mxu0 0.0
    %1354 = vmatpush1.xpose.msra.mxu0 0.0
    %1355 = vmatprep.subr.mxu0 0.0
    %1356 = vmatpush1.xpose.msra.mxu0 0.0
    %1357 = vmatprep.subr.mxu0 0.0
    %1358 = vmatpush1.xpose.msra.mxu0 0.0
    %1359 = vmatprep.subr.mxu0 0.0
    %1360 = vmatpush1.xpose.msra.mxu0 0.0
    %1361 = vmatprep.subr.mxu0 0.0
    %1362 = vmatpush1.xpose.msra.mxu0 0.0
    %1363 = vmatprep.subr.mxu0 0.0
    %1364 = vmatpush1.xpose.msra.mxu0 0.0
    %1365 = vmatprep.subr.mxu0 0.0
    %1366 = vmatpush1.xpose.msra.mxu0 0.0
    %1367 = vmatprep.subr.mxu0 0.0
    %1368 = vmatpush1.xpose.msra.mxu0 0.0
    %1369 = vmatprep.subr.mxu0 0.0
    %1370 = vmatpush1.xpose.msra.mxu0 0.0
    %1371 = vmatprep.subr.mxu0 0.0
    %1372 = vmatpush1.xpose.msra.mxu0 0.0
    %1373 = vmatprep.subr.mxu0 0.0
    %1374 = vmatpush1.xpose.msra.mxu0 0.0
    %1375 = vmatprep.subr.mxu0 0.0
    %1376 = vmatpush1.xpose.msra.mxu0 %v1343
    %1377 = vmatprep.subr.mxu0 0.0
    %1378 = vmatpush2.xpose.msra.mxu0 0.0
    %1379 = vmatprep.subr.mxu0 0.0
    %1380 = vmatpush2.xpose.msra.mxu0 0.0
    %1381 = vmatprep.subr.mxu0 0.0
    %1382 = vmatpush2.xpose.msra.mxu0 0.0
    %1383 = vmatprep.subr.mxu0 0.0
    %1384 = vmatpush2.xpose.msra.mxu0 0.0
    %1385 = vmatprep.subr.mxu0 0.0
    %1386 = vmatpush2.xpose.msra.mxu0 0.0
    %1387 = vmatprep.subr.mxu0 0.0
    %1388 = vmatpush2.xpose.msra.mxu0 0.0
    %1389 = vmatprep.subr.mxu0 0.0
    %1390 = vmatpush2.xpose.msra.mxu0 0.0
    %1391 = vmatprep.subr.mxu0 0.0
    %1392 = vmatpush2.xpose.msra.mxu0 0.0
    %1393 = vmatprep.subr.mxu0 0.0
    %1394 = vmatpush2.xpose.msra.mxu0 0.0
    %1395 = vmatprep.subr.mxu0 0.0
    %1396 = vmatpush2.xpose.msra.mxu0 0.0
    %1397 = vmatprep.subr.mxu0 0.0
    %1398 = vmatpush2.xpose.msra.mxu0 0.0
    %1399 = vmatprep.subr.mxu0 0.0
    %1400 = vmatpush2.xpose.msra.mxu0 0.0
    %1401 = vmatprep.subr.mxu0 0.0
    %1402 = vmatpush2.xpose.msra.mxu0 0.0
    %1403 = vmatprep.subr.mxu0 0.0
    %1404 = vmatpush2.xpose.msra.mxu0 0.0
    %1405 = vmatprep.subr.mxu0 0.0
    %1406 = vmatpush2.xpose.msra.mxu0 0.0
    %1407 = vmatprep.subr.mxu0 0.0
    %1408 = vmatpush2.xpose.msra.mxu0 0.0
    %1409 = vmatprep.mubr.f32.mxu0 0.0
    %1410 = vmatmul.mubr.f32.gmra.mxu0 %v1341
    %v1411 = vpop.f32.mrf.mxu0
    %v1412 = vadd.f32 0.0, %v1411
    %v1413 = vpop.f32.mrf.mxu0
    %1414 = vdwg.mxu0
    %v1415 = vmul.f32 %v1412, 0.17677669
    %v1416 = vsel %vm151, %v1415, -1e+30
    %v1417 = vsel %vm155, %v1416, -inf
    %1418 = vmax.xlane.f32.xlu0 %v1417
    %v1419 = vpop.xlane.xlu0 %1418
    %v1420 = vsub.f32 %v1416, %v1419
    %v1421 = vmul.f32 %v1420, 1.442695
    %v1422 = vpow.pop %v1421
    %v1423 = vsel %vm155, %v1422, 0.0
    %1424 = vadd.xlane.f32.xlu0 %v1423
    %v1425 = vpop.xlane.xlu0 %1424
    %v1426 = vrcp.pop %v1425
    %v1427 = vmul.f32 %v1422, %v1426
    %1428 = vrot.lane.b32.xlu0 %v144, 40
    %v1429 = vpop.permute.xlu0 %1428
    %v1432 = vsel %vm155, %v1427, 0
    %1434 = vmatprep.subr.mxu0 0.0
    %1435 = vmatpush1.msra.mxu0 0.0
    %1436 = vmatprep.subr.mxu0 0.0
    %1437 = vmatpush1.msra.mxu0 0.0
    %1438 = vmatprep.subr.mxu0 0.0
    %1439 = vmatpush1.msra.mxu0 0.0
    %1440 = vmatprep.subr.mxu0 0.0
    %1441 = vmatpush1.msra.mxu0 0.0
    %1442 = vmatprep.subr.mxu0 0.0
    %1443 = vmatpush1.msra.mxu0 0.0
    %1444 = vmatprep.subr.mxu0 0.0
    %1445 = vmatpush1.msra.mxu0 0.0
    %1446 = vmatprep.subr.mxu0 0.0
    %1447 = vmatpush1.msra.mxu0 0.0
    %1448 = vmatprep.subr.mxu0 0.0
    %1449 = vmatpush1.msra.mxu0 0.0
    %1450 = vmatprep.subr.mxu0 0.0
    %1451 = vmatpush1.msra.mxu0 0.0
    %1452 = vmatprep.subr.mxu0 0.0
    %1453 = vmatpush1.msra.mxu0 0.0
    %1454 = vmatprep.subr.mxu0 0.0
    %1455 = vmatpush1.msra.mxu0 0.0
    %1456 = vmatprep.subr.mxu0 0.0
    %1457 = vmatpush1.msra.mxu0 0.0
    %1458 = vmatprep.subr.mxu0 0.0
    %1459 = vmatpush1.msra.mxu0 0.0
    %1460 = vmatprep.subr.mxu0 0.0
    %1461 = vmatpush1.msra.mxu0 0.0
    %1462 = vmatprep.subr.mxu0 0.0
    %1463 = vmatpush1.msra.mxu0 0.0
    %1464 = vmatprep.subr.mxu0 0.0
    %1465 = vmatpush1.msra.mxu0 %v1429
    %1466 = vmatprep.subr.mxu0 0.0
    %1467 = vmatpush2.msra.mxu0 0.0
    %1468 = vmatprep.subr.mxu0 0.0
    %1469 = vmatpush2.msra.mxu0 0.0
    %1470 = vmatprep.subr.mxu0 0.0
    %1471 = vmatpush2.msra.mxu0 0.0
    %1472 = vmatprep.subr.mxu0 0.0
    %1473 = vmatpush2.msra.mxu0 0.0
    %1474 = vmatprep.subr.mxu0 0.0
    %1475 = vmatpush2.msra.mxu0 0.0
    %1476 = vmatprep.subr.mxu0 0.0
    %1477 = vmatpush2.msra.mxu0 0.0
    %1478 = vmatprep.subr.mxu0 0.0
    %1479 = vmatpush2.msra.mxu0 0.0
    %1480 = vmatprep.subr.mxu0 0.0
    %1481 = vmatpush2.msra.mxu0 0.0
    %1482 = vmatprep.subr.mxu0 0.0
    %1483 = vmatpush2.msra.mxu0 0.0
    %1484 = vmatprep.subr.mxu0 0.0
    %1485 = vmatpush2.msra.mxu0 0.0
    %1486 = vmatprep.subr.mxu0 0.0
    %1487 = vmatpush2.msra.mxu0 0.0
    %1488 = vmatprep.subr.mxu0 0.0
    %1489 = vmatpush2.msra.mxu0 0.0
    %1490 = vmatprep.subr.mxu0 0.0
    %1491 = vmatpush2.msra.mxu0 0.0
    %1492 = vmatprep.subr.mxu0 0.0
    %1493 = vmatpush2.msra.mxu0 0.0
    %1494 = vmatprep.subr.mxu0 0.0
    %1495 = vmatpush2.msra.mxu0 0.0
    %1496 = vmatprep.subr.mxu0 0.0
    %1497 = vmatpush2.msra.mxu0 0.0
    %1498 = vmatprep.mubr.f32.mxu0 0.0
    %1499 = vmatmul.mubr.f32.gmra.mxu0 %v1432
    %v1500 = vpop.f32.mrf.mxu0
    %v1501 = vadd.f32 0.0, %v1500
    %v1502 = vpop.f32.mrf.mxu0
    %1503 = vdwg.mxu0
    %1505 = vrot.lane.b32.xlu0 %v1167, 8
    %v1506 = vpop.permute.xlu0 %1505
    %1509 = vrot.lane.b32.xlu0 %v1334, 16
    %v1510 = vpop.permute.xlu0 %1509
    %1513 = vrot.lane.b32.xlu0 %v1501, 24
    %v1514 = vpop.permute.xlu0 %1513
    %v1516 = vsel %vm155, %v1000, %v1506
    %v1517 = vsel %vm833, %v1516, %v1510
    %v1518 = vsel %vm835, %v1517, %v1514
    %v1519 = vld [vmem:[#allocation7] sm:$0xff]
    %v1520 = vld [vmem:[#allocation7 + $0x8] sm:$0xff]
    %v1521 = vld [vmem:[#allocation7 + $0x10] sm:$0xff]
    %v1522 = vld [vmem:[#allocation7 + $0x18] sm:$0xff]
    %v1523 = vld [vmem:[%s3] sm:$0x1]
    %v1525 = vlaneseq
    %v1526 = vshrl.u32 %v1525, 7
    %v1527 = vsub.s32 0, %v1526
    %v1528 = vrot.slane %v1523, %v1527
    %v1531 = vsel %vm65, %v836, 0
    %v1534 = vsel %vm65, %v1518, 0
    %1536 = vmatprep.subr.mxu0 0.0
    %1537 = vmatpush1.msra.mxu0 0.0
    %1538 = vmatprep.subr.mxu0 0.0
    %1539 = vmatpush1.msra.mxu0 0.0
    %1540 = vmatprep.subr.mxu0 0.0
    %1541 = vmatpush1.msra.mxu0 0.0
    %1542 = vmatprep.subr.mxu0 0.0
    %1543 = vmatpush1.msra.mxu0 0.0
    %1544 = vmatprep.subr.mxu0 0.0
    %1545 = vmatpush1.msra.mxu0 0.0
    %1546 = vmatprep.subr.mxu0 0.0
    %1547 = vmatpush1.msra.mxu0 0.0
    %1548 = vmatprep.subr.mxu0 0.0
    %1549 = vmatpush1.msra.mxu0 0.0
    %1550 = vmatprep.subr.mxu0 0.0
    %1551 = vmatpush1.msra.mxu0 0.0
    %1552 = vmatprep.subr.mxu0 0.0
    %1553 = vmatpush1.msra.mxu0 0.0
    %1554 = vmatprep.subr.mxu0 0.0
    %1555 = vmatpush1.msra.mxu0 0.0
    %1556 = vmatprep.subr.mxu0 0.0
    %1557 = vmatpush1.msra.mxu0 0.0
    %1558 = vmatprep.subr.mxu0 0.0
    %1559 = vmatpush1.msra.mxu0 0.0
    %1560 = vmatprep.subr.mxu0 0.0
    %1561 = vmatpush1.msra.mxu0 %v1522
    %1562 = vmatprep.subr.mxu0 0.0
    %1563 = vmatpush1.msra.mxu0 %v1521
    %1564 = vmatprep.subr.mxu0 0.0
    %1565 = vmatpush1.msra.mxu0 %v1520
    %1566 = vmatprep.subr.mxu0 0.0
    %1567 = vmatpush1.msra.mxu0 %v1519
    %1568 = vmatprep.subr.mxu0 0.0
    %1569 = vmatpush2.msra.mxu0 0.0
    %1570 = vmatprep.subr.mxu0 0.0
    %1571 = vmatpush2.msra.mxu0 0.0
    %1572 = vmatprep.subr.mxu0 0.0
    %1573 = vmatpush2.msra.mxu0 0.0
    %1574 = vmatprep.subr.mxu0 0.0
    %1575 = vmatpush2.msra.mxu0 0.0
    %1576 = vmatprep.subr.mxu0 0.0
    %1577 = vmatpush2.msra.mxu0 0.0
    %1578 = vmatprep.subr.mxu0 0.0
    %1579 = vmatpush2.msra.mxu0 0.0
    %1580 = vmatprep.subr.mxu0 0.0
    %1581 = vmatpush2.msra.mxu0 0.0
    %1582 = vmatprep.subr.mxu0 0.0
    %1583 = vmatpush2.msra.mxu0 0.0
    %1584 = vmatprep.subr.mxu0 0.0
    %1585 = vmatpush2.msra.mxu0 0.0
    %1586 = vmatprep.subr.mxu0 0.0
    %1587 = vmatpush2.msra.mxu0 0.0
    %1588 = vmatprep.subr.mxu0 0.0
    %1589 = vmatpush2.msra.mxu0 0.0
    %1590 = vmatprep.subr.mxu0 0.0
    %1591 = vmatpush2.msra.mxu0 0.0
    %1592 = vmatprep.subr.mxu0 0.0
    %1593 = vmatpush2.msra.mxu0 0.0
    %1594 = vmatprep.subr.mxu0 0.0
    %1595 = vmatpush2.msra.mxu0 0.0
    %1596 = vmatprep.subr.mxu0 0.0
    %1597 = vmatpush2.msra.mxu0 0.0
    %1598 = vmatprep.subr.mxu0 0.0
    %1599 = vmatpush2.msra.mxu0 0.0
    %1600 = vmatprep.mubr.f32.mxu0 0.0
    %1601 = vmatmul.mubr.f32.gmra.mxu0 %v1531
    %v1602 = vpop.f32.mrf.mxu0
    %v1603 = vadd.f32 %v1528, %v1602
    %v1604 = vpop.f32.mrf.mxu0
    %1605 = vmatprep.mubr.f32.mxu0 0.0
    %1606 = vmatmul.mubr.f32.gmra.mxu0 %v1534
    %v1607 = vpop.f32.mrf.mxu0
    %v1608 = vadd.f32 %v1528, %v1607
    %v1609 = vpop.f32.mrf.mxu0
    %1610 = vdwg.mxu0
    %1611 = vst.msk [vmem:[#allocation8] sm:$0xff] %vm65, %v1603
    %1612 = vst.msk [vmem:[#allocation8 + $0x8] sm:$0xff] %vm65, %v1608
    // Predicated region
    $region30: #{tpu_custom_call.1} parent=1 // pred_check
      _
    $region31: #{tpu_custom_call.1} parent=1 // pred_check_branch
      %1614 = sbr.rel (0) target = $region33
    $region32: #{tpu_custom_call.1} parent=1 // pred_region
      %s1616 = ssub.s32 256, 256
      %1617 = vsyncadd [#allocation4], %s1616
      %s1618 = sshll.u32 [#allocation8], 4
      %s1619 = int_to_ptr.vmem [resolvable:$true] %s1618
      %1624 = dma.vmem_to_hbm [thread:$0]  %s1619, 256, %s4, [#allocation4], 128, 128, 8
    $region33: #{tpu_custom_call.1} parent=1 // pred_fallthru
      _
    // Predicated region
    $region34: #{tpu_custom_call.1} parent=1 // pred_check
      _
    $region35: #{tpu_custom_call.1} parent=1 // pred_check_branch
      %1626 = sbr.rel (0) target = $region37
    $region36: #{tpu_custom_call.1} parent=1 // pred_region
      %1627 = dma.done [#allocation4], 256
    $region37: #{tpu_custom_call.1} parent=1 // pred_fallthru
      _
    %1628 = vsyncpa [#allocation3], 1
    %1629 = vsyncpa [#allocation6], 1
    %1630 = vsyncpa [#allocation4], 1

</llo_original>
